<compile_context>
chip_gen: v6e
topology: v6e:2x2x1
jax: 0.10.0
libtpu: 0.0.40
codegen_flags: <defaults>
</compile_context>

<pallas_src>
import math

import jax
import jax.numpy as jnp
from jax.experimental import pallas as pl
from jax.experimental.pallas import tpu as pltpu

BN_EPS = 1e-5


# -----------------------------------------------------------------------------
# Kernel
# -----------------------------------------------------------------------------
def _dmlp_kernel(x_ref, w1_ref, b1_ref, w2_ref, b2_ref, w3_ref, b3_ref, o_ref):
    # x arrives as f32 and is cast to bf16 *inside* the kernel (avoids a
    # separate host-side cast+pad pass over HBM).
    x = x_ref[...].astype(w1_ref.dtype)

    # Layer 1: Linear(D, H1) + ReLU          (BN1 folded into w2/b2 host-side)
    h = jnp.dot(x, w1_ref[...], preferred_element_type=jnp.float32) + b1_ref[...]
    h = jnp.maximum(h, 0.0).astype(w2_ref.dtype)      # fused relu + bf16 cast

    # Layer 2: Linear(H1, H2) + ReLU         (BN2 folded into w3/b3 host-side)
    h = jnp.dot(h, w2_ref[...], preferred_element_type=jnp.float32) + b2_ref[...]
    h = jnp.maximum(h, 0.0).astype(w3_ref.dtype)

    # Output layer: Linear(H2, C), no activation (last_act=False).
    y = jnp.dot(h, w3_ref[...], preferred_element_type=jnp.float32) + b3_ref[...]

    # Lane-dense store: (block_n, C) -> (block_n*C//128, 128) so the writeback
    # uses unmasked 128-lane stores.  When the plain layout is in use,
    # o_ref.shape == y.shape and the reshape is a no-op.
    o_ref[...] = y.reshape(o_ref.shape).astype(o_ref.dtype)


# -----------------------------------------------------------------------------
# Host-side helpers
# -----------------------------------------------------------------------------
def _round_up(x, m):
    return (x + m - 1) // m * m


def _num_tensorcores():
    """2 on dual-TC / megacore chips (v4, v5p, v7x); 1 on v5e/v6e; 1 fallback."""
    try:
        kind = jax.devices()[0].device_kind.lower().replace(" ", "")
    except Exception:
        return 1
    return 2 if any(t in kind for t in ("v4", "v5p", "v7", "7x")) else 1


def _choose_block_n(n, num_tc, row_align, cap):
    """Row-tile size (multiple of row_align, soft-capped at `cap` rows).

    * 1-TC chips (v5e/v6e): one whole-batch tile whenever it fits the cap --
      the grid is a serial loop there, so splitting small batches only adds
      ~0.35 us/step of pipeline overhead.
    * 2-TC chips (v7x): an even tile count (8/4/2) with >=512-row tiles so
      both TensorCores get balanced work; small batches stay single-tile.
    """
    padded = _round_up(max(n, 1), row_align)
    block = padded
    if num_tc >= 2:
        for tiles in (8, 4, 2):
            if pl.cdiv(padded, tiles) >= 512:
                block = _round_up(pl.cdiv(padded, tiles), row_align)
                break
    if block > cap:
        tiles = pl.cdiv(padded, cap)
        if num_tc >= 2:
            tiles = _round_up(tiles, 2)           # even tile count for 2 TCs
        block = _round_up(pl.cdiv(padded, tiles), row_align)
    return block


def _fold_batchnorm(p):
    """Fold inference-mode BN affine into the following linear layer (f32)."""
    scale1 = p["g1"] * jax.lax.rsqrt(p["v1"] + BN_EPS)
    shift1 = p["beta1"] - p["m1"] * scale1
    scale2 = p["g2"] * jax.lax.rsqrt(p["v2"] + BN_EPS)
    shift2 = p["beta2"] - p["m2"] * scale2

    w2f = scale1[:, None] * p["w2"]
    b2f = p["b2"] + shift1 @ p["w2"]
    w3f = scale2[:, None] * p["w3"]
    b3f = p["b3"] + shift2 @ p["w3"]
    return p["w1"], p["b1"], w2f, b2f, w3f, b3f


def _build_call(Np, D, H1, H2, C, block_n, *, lane_dense, single_buffer, cost):
    grid = (Np // block_n,)

    if single_buffer:
        # Grid-invariant operands: DMA'd exactly once, no double buffer needed.
        def const_spec(shape):
            return pl.BlockSpec(shape, lambda i: (0, 0),
                                pipeline_mode=pl.Buffered(buffer_count=1))
    else:
        def const_spec(shape):
            return pl.BlockSpec(shape, lambda i: (0, 0))

    in_specs = [
        pl.BlockSpec((block_n, D), lambda i: (i, 0)),       # streaming x tile
        const_spec((D, H1)), const_spec((1, H1)),
        const_spec((H1, H2)), const_spec((1, H2)),
        const_spec((H2, C)), const_spec((1, C)),
    ]

    if lane_dense:
        out_shape = jax.ShapeDtypeStruct((Np * C // 128, 128), jnp.float32)
        out_specs = pl.BlockSpec((block_n * C // 128, 128), lambda i: (i, 0))
    else:
        out_shape = jax.ShapeDtypeStruct((Np, C), jnp.float32)
        out_specs = pl.BlockSpec((block_n, C), lambda i: (i, 0))

    return pl.pallas_call(
        _dmlp_kernel,
        out_shape=out_shape,
        grid_spec=pltpu.PrefetchScalarGridSpec(
            num_scalar_prefetch=0,
            grid=grid,
            in_specs=in_specs,
            out_specs=out_specs,
        ),
        compiler_params=pltpu.CompilerParams(
            dimension_semantics=("parallel",),
        ),
        cost_estimate=cost,
    )


def dmlp_forward(x, params, *, block_n=None, compute_dtype=jnp.bfloat16):
    """x: (N, D) f32.  params: dict of DMLP weights (see init_params)."""
    x = jnp.asarray(x, jnp.float32)
    N, D = x.shape

    w1, b1, w2, b2, w3, b3 = _fold_batchnorm(params)
    H1, H2, C = w1.shape[1], w2.shape[1], w3.shape[1]

    # Lane-dense output pays off for small C; it needs block_n*C % 1024 == 0 so
    # multi-tile output blocks stay (8,128)-aligned -> require C % 8 == 0.
    lane_dense = (0 < C < 128) and (C % 8 == 0)
    row_align = max(8, 1024 // math.gcd(C, 1024)) if lane_dense else 8

    num_tc = _num_tensorcores()

    # VMEM-aware soft cap on the row tile (review: 2048-4096 rows; per-row
    # footprint here is ~1 KB so 4096 is reached for the default dims).
    bytes_per_row = 4 * (2 * D + 2 * H1 + 2 * H2 + 2 * C)
    cap = min(4096, max(512, (10 << 20) // max(bytes_per_row, 1)))
    cap = max(row_align, cap - cap % row_align)

    if block_n is None:
        block_n = _choose_block_n(N, num_tc, row_align, cap)
    block_n = _round_up(block_n, row_align)

    # Pad the batch (still f32 -- no dtype-change pre-pass) so it tiles evenly;
    # padded rows are sliced off at the end.
    Np = _round_up(N, block_n)
    xp = jnp.pad(x, ((0, Np - N), (0, 0))) if Np != N else x

    # Weights are tiny & grid-invariant: cast once host-side; biases stay f32
    # (added to the f32 accumulator).
    w1d, w2d, w3d = (w.astype(compute_dtype) for w in (w1, w2, w3))
    b1r = b1.reshape(1, -1).astype(jnp.float32)
    b2r = b2.reshape(1, -1).astype(jnp.float32)
    b3r = b3.reshape(1, -1).astype(jnp.float32)

    flops = 2 * Np * (D * H1 + H1 * H2 + H2 * C)
    bytes_accessed = (
        Np * D * 4 + Np * C * 4
        + sum(a.size * a.dtype.itemsize for a in (w1d, w2d, w3d, b1r, b2r, b3r))
    )
    cost = pl.CostEstimate(flops=flops, transcendentals=0,
                           bytes_accessed=bytes_accessed)

    # Feature ladder: lane-dense output + single-buffered constants is the fast
    # path; fall back gracefully if this jax/Mosaic build rejects either.  The
    # last config is the known-good baseline, so real errors still surface.
    attempts = []
    if lane_dense:
        attempts += [dict(lane_dense=True, single_buffer=True),
                     dict(lane_dense=True, single_buffer=False)]
    attempts += [dict(lane_dense=False, single_buffer=True),
                 dict(lane_dense=False, single_buffer=False)]

    args = (xp, w1d, b1r, w2d, b2r, w3d, b3r)
    used = None
    out = None
    for i, cfg in enumerate(attempts):
        try:
            fn = _build_call(Np, D, H1, H2, C, block_n, cost=cost, **cfg)
            out = jax.block_until_ready(fn(*args))
            used = cfg
            break
        except Exception:                       # noqa: BLE001 - try next config
            if i == len(attempts) - 1:
                raise

    if used["lane_dense"]:
        out = out.reshape(Np, C)
    return out[:N]


# -----------------------------------------------------------------------------
# Synthetic params + pure-JAX reference (original, unfolded f32 semantics)
# -----------------------------------------------------------------------------
def init_params(key, D, C, mlp_dim=(128, 64)):
    """Deterministic synthetic parameter init (PyTorch-like uniform fan-in)."""
    H1, H2 = mlp_dim
    keys = jax.random.split(key, 10)

    def linear(kw, kb, fan_in, fan_out):
        bound = 1.0 / jnp.sqrt(fan_in)
        w = jax.random.uniform(kw, (fan_in, fan_out), jnp.float32, -bound, bound)
        b = jax.random.uniform(kb, (fan_out,), jnp.float32, -bound, bound)
        return w, b

    w1, b1 = linear(keys[0], keys[1], D, H1)
    w2, b2 = linear(keys[2], keys[3], H1, H2)
    w3, b3 = linear(keys[4], keys[5], H2, C)

    # BatchNorm (inference mode): nonzero running stats so BN actually matters.
    g1 = 1.0 + 0.1 * jax.random.normal(keys[6], (H1,), jnp.float32)
    beta1 = 0.1 * jax.random.normal(keys[7], (H1,), jnp.float32)
    m1 = 0.05 * jax.random.normal(keys[8], (H1,), jnp.float32)
    v1 = 1.0 + 0.1 * jax.nn.softplus(jax.random.normal(keys[9], (H1,), jnp.float32))

    keys2 = jax.random.split(keys[9], 4)
    g2 = 1.0 + 0.1 * jax.random.normal(keys2[0], (H2,), jnp.float32)
    beta2 = 0.1 * jax.random.normal(keys2[1], (H2,), jnp.float32)
    m2 = 0.05 * jax.random.normal(keys2[2], (H2,), jnp.float32)
    v2 = 1.0 + 0.1 * jax.nn.softplus(jax.random.normal(keys2[3], (H2,), jnp.float32))

    return dict(w1=w1, b1=b1, g1=g1, beta1=beta1, m1=m1, v1=v1,
                w2=w2, b2=b2, g2=g2, beta2=beta2, m2=m2, v2=v2,
                w3=w3, b3=b3)


def dmlp_reference(x, p):
    """Plain-JAX f32 reference of the original (unfolded BN) forward pass."""
    h = x @ p["w1"] + p["b1"]
    h = jnp.maximum(h, 0.0)
    h = (h - p["m1"]) / jnp.sqrt(p["v1"] + BN_EPS) * p["g1"] + p["beta1"]
    h = h @ p["w2"] + p["b2"]
    h = jnp.maximum(h, 0.0)
    h = (h - p["m2"]) / jnp.sqrt(p["v2"] + BN_EPS) * p["g2"] + p["beta2"]
    return h @ p["w3"] + p["b3"]


# -----------------------------------------------------------------------------
if __name__ == "__main__":
    D, C = 32, 8
    key = jax.random.PRNGKey(0)
    kx, kp, kx2 = jax.random.split(key, 3)
    params = init_params(kp, D, C)

    # Test 1: tiny batch (single tile; padded up to the lane-dense row alignment).
    N1 = 8
    x1 = jax.random.normal(kx, (N1, D), jnp.float32)
    out1 = jax.block_until_ready(dmlp_forward(x1, params))
    ref1 = dmlp_reference(x1, params)
    assert out1.shape == (N1, C)
    # bf16 operands -> allow bf16-level tolerance vs the f32 reference.
    assert jnp.allclose(out1, ref1, atol=2e-2, rtol=2e-2), "mismatch (N=8)"

    # Test 2: ragged batch exercising padding + the slice-back of padded rows.
    N2 = 200
    x2 = jax.random.normal(kx2, (N2, D), jnp.float32)
    out2 = jax.block_until_ready(dmlp_forward(x2, params))
    ref2 = dmlp_reference(x2, params)
    assert out2.shape == (N2, C)
    assert jnp.allclose(out2, ref2, atol=2e-2, rtol=2e-2), "mismatch (N=200)"

    print("KERNEL_OK")
</pallas_src>

<mosaic_0001>
module attributes {stable_mosaic.version = 11 : i64} {
  func.func @_dmlp_kernel(%arg0: i32, %arg1: memref<128x32xf32, #tpu.memory_space<vmem>>, %arg2: memref<32x128xbf16, #tpu.memory_space<vmem>>, %arg3: memref<1x128xf32, #tpu.memory_space<vmem>>, %arg4: memref<128x64xbf16, #tpu.memory_space<vmem>>, %arg5: memref<1x64xf32, #tpu.memory_space<vmem>>, %arg6: memref<64x8xbf16, #tpu.memory_space<vmem>>, %arg7: memref<1x8xf32, #tpu.memory_space<vmem>>, %arg8: memref<8x128xf32, #tpu.memory_space<vmem>>) attributes {dimension_semantics = [#tpu.dimension_semantics<parallel>], iteration_bounds = array<i64: 1>, scalar_prefetch = 0 : i64, scratch_operands = 0 : i64, tpu.core_type = #tpu.core_type<tc>, window_params = [{transform_indices = @transform_0, window_bounds = array<i64: 128, 32>}, {pipeline_mode = #tpu.pipeline_mode<synchronous>, transform_indices = @transform_1, window_bounds = array<i64: 32, 128>}, {pipeline_mode = #tpu.pipeline_mode<synchronous>, transform_indices = @transform_2, window_bounds = array<i64: 1, 128>}, {pipeline_mode = #tpu.pipeline_mode<synchronous>, transform_indices = @transform_3, window_bounds = array<i64: 128, 64>}, {pipeline_mode = #tpu.pipeline_mode<synchronous>, transform_indices = @transform_4, window_bounds = array<i64: 1, 64>}, {pipeline_mode = #tpu.pipeline_mode<synchronous>, transform_indices = @transform_5, window_bounds = array<i64: 64, 8>}, {pipeline_mode = #tpu.pipeline_mode<synchronous>, transform_indices = @transform_6, window_bounds = array<i64: 1, 8>}, {transform_indices = @transform_7, window_bounds = array<i64: 8, 128>}]} {
    %c0 = arith.constant 0 : index
    %c0_0 = arith.constant 0 : index
    %0 = vector.load %arg1[%c0, %c0_0] : memref<128x32xf32, #tpu.memory_space<vmem>>, vector<128x32xf32>
    %1 = arith.truncf %0 : vector<128x32xf32> to vector<128x32xbf16>
    %c0_1 = arith.constant 0 : index
    %c0_2 = arith.constant 0 : index
    %2 = vector.load %arg2[%c0_1, %c0_2] : memref<32x128xbf16, #tpu.memory_space<vmem>>, vector<32x128xbf16>
    %cst = arith.constant dense<0.000000e+00> : vector<128x128xf32>
    %3 = tpu.matmul %1, %2, %cst {dimension_numbers = #tpu.dot_dimension_numbers<[1], [0], [0], [1], [0, 0, 1, 1], [], []>} : vector<128x32xbf16>, vector<32x128xbf16>, vector<128x128xf32> -> vector<128x128xf32>
    %c0_3 = arith.constant 0 : index
    %c0_4 = arith.constant 0 : index
    %4 = vector.load %arg3[%c0_3, %c0_4] : memref<1x128xf32, #tpu.memory_space<vmem>>, vector<1x128xf32>
    %5 = vector.broadcast %4 : vector<1x128xf32> to vector<128x128xf32>
    %6 = arith.addf %3, %5 : vector<128x128xf32>
    %cst_5 = arith.constant 0.000000e+00 : f32
    %7 = vector.broadcast %cst_5 : f32 to vector<128x128xf32>
    %8 = arith.maximumf %6, %7 : vector<128x128xf32>
    %9 = arith.truncf %8 : vector<128x128xf32> to vector<128x128xbf16>
    %c0_6 = arith.constant 0 : index
    %c0_7 = arith.constant 0 : index
    %10 = vector.load %arg4[%c0_6, %c0_7] : memref<128x64xbf16, #tpu.memory_space<vmem>>, vector<128x64xbf16>
    %cst_8 = arith.constant dense<0.000000e+00> : vector<128x64xf32>
    %11 = tpu.matmul %9, %10, %cst_8 {dimension_numbers = #tpu.dot_dimension_numbers<[1], [0], [0], [1], [0, 0, 1, 1], [], []>} : vector<128x128xbf16>, vector<128x64xbf16>, vector<128x64xf32> -> vector<128x64xf32>
    %c0_9 = arith.constant 0 : index
    %c0_10 = arith.constant 0 : index
    %12 = vector.load %arg5[%c0_9, %c0_10] : memref<1x64xf32, #tpu.memory_space<vmem>>, vector<1x64xf32>
    %13 = vector.broadcast %12 : vector<1x64xf32> to vector<128x64xf32>
    %14 = arith.addf %11, %13 : vector<128x64xf32>
    %cst_11 = arith.constant 0.000000e+00 : f32
    %15 = vector.broadcast %cst_11 : f32 to vector<128x64xf32>
    %16 = arith.maximumf %14, %15 : vector<128x64xf32>
    %17 = arith.truncf %16 : vector<128x64xf32> to vector<128x64xbf16>
    %c0_12 = arith.constant 0 : index
    %c0_13 = arith.constant 0 : index
    %18 = vector.load %arg6[%c0_12, %c0_13] : memref<64x8xbf16, #tpu.memory_space<vmem>>, vector<64x8xbf16>
    %cst_14 = arith.constant dense<0.000000e+00> : vector<128x8xf32>
    %19 = tpu.matmul %17, %18, %cst_14 {dimension_numbers = #tpu.dot_dimension_numbers<[1], [0], [0], [1], [0, 0, 1, 1], [], []>} : vector<128x64xbf16>, vector<64x8xbf16>, vector<128x8xf32> -> vector<128x8xf32>
    %c0_15 = arith.constant 0 : index
    %c0_16 = arith.constant 0 : index
    %20 = vector.load %arg7[%c0_15, %c0_16] : memref<1x8xf32, #tpu.memory_space<vmem>>, vector<1x8xf32>
    %21 = vector.broadcast %20 : vector<1x8xf32> to vector<128x8xf32>
    %22 = arith.addf %19, %21 : vector<128x8xf32>
    %23 = vector.shape_cast %22 : vector<128x8xf32> to vector<8x128xf32>
    %c0_17 = arith.constant 0 : index
    %c0_18 = arith.constant 0 : index
    %24 = vector.load %arg8[%c0_17, %c0_18] : memref<8x128xf32, #tpu.memory_space<vmem>>, vector<8x128xf32>
    tpu.vector_store %arg8[%c0_17, %c0_18], %23 {strides = array<i32>} : memref<8x128xf32, #tpu.memory_space<vmem>>, vector<8x128xf32>,
    return
  }
  func.func @transform_0(%arg0: i32) -> (i32, i32) {
    %c0_i32 = arith.constant 0 : i32
    %c0_i32_0 = arith.constant 0 : i32
    return %arg0, %c0_i32 : i32, i32
  }
  func.func @transform_1(%arg0: i32) -> (i32, i32) {
    %c0_i32 = arith.constant 0 : i32
    %c0_i32_0 = arith.constant 0 : i32
    %c0_i32_1 = arith.constant 0 : i32
    return %c0_i32, %c0_i32_0 : i32, i32
  }
  func.func @transform_2(%arg0: i32) -> (i32, i32) {
    %c0_i32 = arith.constant 0 : i32
    %c0_i32_0 = arith.constant 0 : i32
    %c0_i32_1 = arith.constant 0 : i32
    return %c0_i32, %c0_i32_0 : i32, i32
  }
  func.func @transform_3(%arg0: i32) -> (i32, i32) {
    %c0_i32 = arith.constant 0 : i32
    %c0_i32_0 = arith.constant 0 : i32
    %c0_i32_1 = arith.constant 0 : i32
    return %c0_i32, %c0_i32_0 : i32, i32
  }
  func.func @transform_4(%arg0: i32) -> (i32, i32) {
    %c0_i32 = arith.constant 0 : i32
    %c0_i32_0 = arith.constant 0 : i32
    %c0_i32_1 = arith.constant 0 : i32
    return %c0_i32, %c0_i32_0 : i32, i32
  }
  func.func @transform_5(%arg0: i32) -> (i32, i32) {
    %c0_i32 = arith.constant 0 : i32
    %c0_i32_0 = arith.constant 0 : i32
    %c0_i32_1 = arith.constant 0 : i32
    return %c0_i32, %c0_i32_0 : i32, i32
  }
  func.func @transform_6(%arg0: i32) -> (i32, i32) {
    %c0_i32 = arith.constant 0 : i32
    %c0_i32_0 = arith.constant 0 : i32
    %c0_i32_1 = arith.constant 0 : i32
    return %c0_i32, %c0_i32_0 : i32, i32
  }
  func.func @transform_7(%arg0: i32) -> (i32, i32) {
    %c0_i32 = arith.constant 0 : i32
    %c0_i32_0 = arith.constant 0 : i32
    return %arg0, %c0_i32 : i32, i32
  }
}

module attributes {stable_mosaic.version = 11 : i64} {
  func.func @_dmlp_kernel(%arg0: i32, %arg1: memref<128x32xf32, #tpu.memory_space<vmem>>, %arg2: memref<32x128xbf16, #tpu.memory_space<vmem>>, %arg3: memref<1x128xf32, #tpu.memory_space<vmem>>, %arg4: memref<128x64xbf16, #tpu.memory_space<vmem>>, %arg5: memref<1x64xf32, #tpu.memory_space<vmem>>, %arg6: memref<64x8xbf16, #tpu.memory_space<vmem>>, %arg7: memref<1x8xf32, #tpu.memory_space<vmem>>, %arg8: memref<8x128xf32, #tpu.memory_space<vmem>>) attributes {dimension_semantics = [#tpu.dimension_semantics<parallel>], iteration_bounds = array<i64: 1>, scalar_prefetch = 0 : i64, scratch_operands = 0 : i64, tpu.core_type = #tpu.core_type<tc>, window_params = [{transform_indices = @transform_0, window_bounds = array<i64: 128, 32>}, {pipeline_mode = #tpu.pipeline_mode<synchronous>, transform_indices = @transform_1, window_bounds = array<i64: 32, 128>}, {pipeline_mode = #tpu.pipeline_mode<synchronous>, transform_indices = @transform_2, window_bounds = array<i64: 1, 128>}, {pipeline_mode = #tpu.pipeline_mode<synchronous>, transform_indices = @transform_3, window_bounds = array<i64: 128, 64>}, {pipeline_mode = #tpu.pipeline_mode<synchronous>, transform_indices = @transform_4, window_bounds = array<i64: 1, 64>}, {pipeline_mode = #tpu.pipeline_mode<synchronous>, transform_indices = @transform_5, window_bounds = array<i64: 64, 8>}, {pipeline_mode = #tpu.pipeline_mode<synchronous>, transform_indices = @transform_6, window_bounds = array<i64: 1, 8>}, {transform_indices = @transform_7, window_bounds = array<i64: 8, 128>}]} {
    %c0 = arith.constant 0 : index
    %c0_0 = arith.constant 0 : index
    %0 = vector.load %arg1[%c0, %c0_0] : memref<128x32xf32, #tpu.memory_space<vmem>>, vector<128x32xf32>
    %1 = arith.truncf %0 : vector<128x32xf32> to vector<128x32xbf16>
    %c0_1 = arith.constant 0 : index
    %c0_2 = arith.constant 0 : index
    %2 = vector.load %arg2[%c0_1, %c0_2] : memref<32x128xbf16, #tpu.memory_space<vmem>>, vector<32x128xbf16>
    %cst = arith.constant dense<0.000000e+00> : vector<128x128xf32>
    %3 = tpu.matmul %1, %2, %cst {dimension_numbers = #tpu.dot_dimension_numbers<[1], [0], [0], [1], [0, 0, 1, 1], [], []>} : vector<128x32xbf16>, vector<32x128xbf16>, vector<128x128xf32> -> vector<128x128xf32>
    %c0_3 = arith.constant 0 : index
    %c0_4 = arith.constant 0 : index
    %4 = vector.load %arg3[%c0_3, %c0_4] : memref<1x128xf32, #tpu.memory_space<vmem>>, vector<1x128xf32>
    %5 = vector.broadcast %4 : vector<1x128xf32> to vector<128x128xf32>
    %6 = arith.addf %3, %5 : vector<128x128xf32>
    %cst_5 = arith.constant 0.000000e+00 : f32
    %7 = vector.broadcast %cst_5 : f32 to vector<128x128xf32>
    %8 = arith.maximumf %6, %7 : vector<128x128xf32>
    %9 = arith.truncf %8 : vector<128x128xf32> to vector<128x128xbf16>
    %c0_6 = arith.constant 0 : index
    %c0_7 = arith.constant 0 : index
    %10 = vector.load %arg4[%c0_6, %c0_7] : memref<128x64xbf16, #tpu.memory_space<vmem>>, vector<128x64xbf16>
    %cst_8 = arith.constant dense<0.000000e+00> : vector<128x64xf32>
    %11 = tpu.matmul %9, %10, %cst_8 {dimension_numbers = #tpu.dot_dimension_numbers<[1], [0], [0], [1], [0, 0, 1, 1], [], []>} : vector<128x128xbf16>, vector<128x64xbf16>, vector<128x64xf32> -> vector<128x64xf32>
    %c0_9 = arith.constant 0 : index
    %c0_10 = arith.constant 0 : index
    %12 = vector.load %arg5[%c0_9, %c0_10] : memref<1x64xf32, #tpu.memory_space<vmem>>, vector<1x64xf32>
    %13 = vector.broadcast %12 : vector<1x64xf32> to vector<128x64xf32>
    %14 = arith.addf %11, %13 : vector<128x64xf32>
    %cst_11 = arith.constant 0.000000e+00 : f32
    %15 = vector.broadcast %cst_11 : f32 to vector<128x64xf32>
    %16 = arith.maximumf %14, %15 : vector<128x64xf32>
    %17 = arith.truncf %16 : vector<128x64xf32> to vector<128x64xbf16>
    %c0_12 = arith.constant 0 : index
    %c0_13 = arith.constant 0 : index
    %18 = vector.load %arg6[%c0_12, %c0_13] : memref<64x8xbf16, #tpu.memory_space<vmem>>, vector<64x8xbf16>
    %cst_14 = arith.constant dense<0.000000e+00> : vector<128x8xf32>
    %19 = tpu.matmul %17, %18, %cst_14 {dimension_numbers = #tpu.dot_dimension_numbers<[1], [0], [0], [1], [0, 0, 1, 1], [], []>} : vector<128x64xbf16>, vector<64x8xbf16>, vector<128x8xf32> -> vector<128x8xf32>
    %c0_15 = arith.constant 0 : index
    %c0_16 = arith.constant 0 : index
    %20 = vector.load %arg7[%c0_15, %c0_16] : memref<1x8xf32, #tpu.memory_space<vmem>>, vector<1x8xf32>
    %21 = vector.broadcast %20 : vector<1x8xf32> to vector<128x8xf32>
    %22 = arith.addf %19, %21 : vector<128x8xf32>
    %23 = vector.shape_cast %22 : vector<128x8xf32> to vector<8x128xf32>
    %c0_17 = arith.constant 0 : index
    %c0_18 = arith.constant 0 : index
    %24 = vector.load %arg8[%c0_17, %c0_18] : memref<8x128xf32, #tpu.memory_space<vmem>>, vector<8x128xf32>
    tpu.vector_store %arg8[%c0_17, %c0_18], %23 {strides = array<i32>} : memref<8x128xf32, #tpu.memory_space<vmem>>, vector<8x128xf32>,
    return
  }
  func.func @transform_0(%arg0: i32) -> (i32, i32) {
    %c0_i32 = arith.constant 0 : i32
    %c0_i32_0 = arith.constant 0 : i32
    return %arg0, %c0_i32 : i32, i32
  }
  func.func @transform_1(%arg0: i32) -> (i32, i32) {
    %c0_i32 = arith.constant 0 : i32
    %c0_i32_0 = arith.constant 0 : i32
    %c0_i32_1 = arith.constant 0 : i32
    return %c0_i32, %c0_i32_0 : i32, i32
  }
  func.func @transform_2(%arg0: i32) -> (i32, i32) {
    %c0_i32 = arith.constant 0 : i32
    %c0_i32_0 = arith.constant 0 : i32
    %c0_i32_1 = arith.constant 0 : i32
    return %c0_i32, %c0_i32_0 : i32, i32
  }
  func.func @transform_3(%arg0: i32) -> (i32, i32) {
    %c0_i32 = arith.constant 0 : i32
    %c0_i32_0 = arith.constant 0 : i32
    %c0_i32_1 = arith.constant 0 : i32
    return %c0_i32, %c0_i32_0 : i32, i32
  }
  func.func @transform_4(%arg0: i32) -> (i32, i32) {
    %c0_i32 = arith.constant 0 : i32
    %c0_i32_0 = arith.constant 0 : i32
    %c0_i32_1 = arith.constant 0 : i32
    return %c0_i32, %c0_i32_0 : i32, i32
  }
  func.func @transform_5(%arg0: i32) -> (i32, i32) {
    %c0_i32 = arith.constant 0 : i32
    %c0_i32_0 = arith.constant 0 : i32
    %c0_i32_1 = arith.constant 0 : i32
    return %c0_i32, %c0_i32_0 : i32, i32
  }
  func.func @transform_6(%arg0: i32) -> (i32, i32) {
    %c0_i32 = arith.constant 0 : i32
    %c0_i32_0 = arith.constant 0 : i32
    %c0_i32_1 = arith.constant 0 : i32
    return %c0_i32, %c0_i32_0 : i32, i32
  }
  func.func @transform_7(%arg0: i32) -> (i32, i32) {
    %c0_i32 = arith.constant 0 : i32
    %c0_i32_0 = arith.constant 0 : i32
    return %arg0, %c0_i32 : i32, i32
  }
}

module attributes {stable_mosaic.version = 11 : i64} {
  func.func @_dmlp_kernel(%arg0: i32, %arg1: memref<128x32xf32, #tpu.memory_space<vmem>>, %arg2: memref<32x128xbf16, #tpu.memory_space<vmem>>, %arg3: memref<1x128xf32, #tpu.memory_space<vmem>>, %arg4: memref<128x64xbf16, #tpu.memory_space<vmem>>, %arg5: memref<1x64xf32, #tpu.memory_space<vmem>>, %arg6: memref<64x8xbf16, #tpu.memory_space<vmem>>, %arg7: memref<1x8xf32, #tpu.memory_space<vmem>>, %arg8: memref<128x8xf32, #tpu.memory_space<vmem>>) attributes {dimension_semantics = [#tpu.dimension_semantics<parallel>], iteration_bounds = array<i64: 1>, scalar_prefetch = 0 : i64, scratch_operands = 0 : i64, tpu.core_type = #tpu.core_type<tc>, window_params = [{transform_indices = @transform_0, window_bounds = array<i64: 128, 32>}, {pipeline_mode = #tpu.pipeline_mode<synchronous>, transform_indices = @transform_1, window_bounds = array<i64: 32, 128>}, {pipeline_mode = #tpu.pipeline_mode<synchronous>, transform_indices = @transform_2, window_bounds = array<i64: 1, 128>}, {pipeline_mode = #tpu.pipeline_mode<synchronous>, transform_indices = @transform_3, window_bounds = array<i64: 128, 64>}, {pipeline_mode = #tpu.pipeline_mode<synchronous>, transform_indices = @transform_4, window_bounds = array<i64: 1, 64>}, {pipeline_mode = #tpu.pipeline_mode<synchronous>, transform_indices = @transform_5, window_bounds = array<i64: 64, 8>}, {pipeline_mode = #tpu.pipeline_mode<synchronous>, transform_indices = @transform_6, window_bounds = array<i64: 1, 8>}, {transform_indices = @transform_7, window_bounds = array<i64: 128, 8>}]} {
    %c0 = arith.constant 0 : index
    %c0_0 = arith.constant 0 : index
    %0 = vector.load %arg1[%c0, %c0_0] : memref<128x32xf32, #tpu.memory_space<vmem>>, vector<128x32xf32>
    %1 = arith.truncf %0 : vector<128x32xf32> to vector<128x32xbf16>
    %c0_1 = arith.constant 0 : index
    %c0_2 = arith.constant 0 : index
    %2 = vector.load %arg2[%c0_1, %c0_2] : memref<32x128xbf16, #tpu.memory_space<vmem>>, vector<32x128xbf16>
    %cst = arith.constant dense<0.000000e+00> : vector<128x128xf32>
    %3 = tpu.matmul %1, %2, %cst {dimension_numbers = #tpu.dot_dimension_numbers<[1], [0], [0], [1], [0, 0, 1, 1], [], []>} : vector<128x32xbf16>, vector<32x128xbf16>, vector<128x128xf32> -> vector<128x128xf32>
    %c0_3 = arith.constant 0 : index
    %c0_4 = arith.constant 0 : index
    %4 = vector.load %arg3[%c0_3, %c0_4] : memref<1x128xf32, #tpu.memory_space<vmem>>, vector<1x128xf32>
    %5 = vector.broadcast %4 : vector<1x128xf32> to vector<128x128xf32>
    %6 = arith.addf %3, %5 : vector<128x128xf32>
    %cst_5 = arith.constant 0.000000e+00 : f32
    %7 = vector.broadcast %cst_5 : f32 to vector<128x128xf32>
    %8 = arith.maximumf %6, %7 : vector<128x128xf32>
    %9 = arith.truncf %8 : vector<128x128xf32> to vector<128x128xbf16>
    %c0_6 = arith.constant 0 : index
    %c0_7 = arith.constant 0 : index
    %10 = vector.load %arg4[%c0_6, %c0_7] : memref<128x64xbf16, #tpu.memory_space<vmem>>, vector<128x64xbf16>
    %cst_8 = arith.constant dense<0.000000e+00> : vector<128x64xf32>
    %11 = tpu.matmul %9, %10, %cst_8 {dimension_numbers = #tpu.dot_dimension_numbers<[1], [0], [0], [1], [0, 0, 1, 1], [], []>} : vector<128x128xbf16>, vector<128x64xbf16>, vector<128x64xf32> -> vector<128x64xf32>
    %c0_9 = arith.constant 0 : index
    %c0_10 = arith.constant 0 : index
    %12 = vector.load %arg5[%c0_9, %c0_10] : memref<1x64xf32, #tpu.memory_space<vmem>>, vector<1x64xf32>
    %13 = vector.broadcast %12 : vector<1x64xf32> to vector<128x64xf32>
    %14 = arith.addf %11, %13 : vector<128x64xf32>
    %cst_11 = arith.constant 0.000000e+00 : f32
    %15 = vector.broadcast %cst_11 : f32 to vector<128x64xf32>
    %16 = arith.maximumf %14, %15 : vector<128x64xf32>
    %17 = arith.truncf %16 : vector<128x64xf32> to vector<128x64xbf16>
    %c0_12 = arith.constant 0 : index
    %c0_13 = arith.constant 0 : index
    %18 = vector.load %arg6[%c0_12, %c0_13] : memref<64x8xbf16, #tpu.memory_space<vmem>>, vector<64x8xbf16>
    %cst_14 = arith.constant dense<0.000000e+00> : vector<128x8xf32>
    %19 = tpu.matmul %17, %18, %cst_14 {dimension_numbers = #tpu.dot_dimension_numbers<[1], [0], [0], [1], [0, 0, 1, 1], [], []>} : vector<128x64xbf16>, vector<64x8xbf16>, vector<128x8xf32> -> vector<128x8xf32>
    %c0_15 = arith.constant 0 : index
    %c0_16 = arith.constant 0 : index
    %20 = vector.load %arg7[%c0_15, %c0_16] : memref<1x8xf32, #tpu.memory_space<vmem>>, vector<1x8xf32>
    %21 = vector.broadcast %20 : vector<1x8xf32> to vector<128x8xf32>
    %22 = arith.addf %19, %21 : vector<128x8xf32>
    %c0_17 = arith.constant 0 : index
    %c0_18 = arith.constant 0 : index
    %23 = vector.load %arg8[%c0_17, %c0_18] : memref<128x8xf32, #tpu.memory_space<vmem>>, vector<128x8xf32>
    tpu.vector_store %arg8[%c0_17, %c0_18], %22 {strides = array<i32>} : memref<128x8xf32, #tpu.memory_space<vmem>>, vector<128x8xf32>,
    return
  }
  func.func @transform_0(%arg0: i32) -> (i32, i32) {
    %c0_i32 = arith.constant 0 : i32
    %c0_i32_0 = arith.constant 0 : i32
    return %arg0, %c0_i32 : i32, i32
  }
  func.func @transform_1(%arg0: i32) -> (i32, i32) {
    %c0_i32 = arith.constant 0 : i32
    %c0_i32_0 = arith.constant 0 : i32
    %c0_i32_1 = arith.constant 0 : i32
    return %c0_i32, %c0_i32_0 : i32, i32
  }
  func.func @transform_2(%arg0: i32) -> (i32, i32) {
    %c0_i32 = arith.constant 0 : i32
    %c0_i32_0 = arith.constant 0 : i32
    %c0_i32_1 = arith.constant 0 : i32
    return %c0_i32, %c0_i32_0 : i32, i32
  }
  func.func @transform_3(%arg0: i32) -> (i32, i32) {
    %c0_i32 = arith.constant 0 : i32
    %c0_i32_0 = arith.constant 0 : i32
    %c0_i32_1 = arith.constant 0 : i32
    return %c0_i32, %c0_i32_0 : i32, i32
  }
  func.func @transform_4(%arg0: i32) -> (i32, i32) {
    %c0_i32 = arith.constant 0 : i32
    %c0_i32_0 = arith.constant 0 : i32
    %c0_i32_1 = arith.constant 0 : i32
    return %c0_i32, %c0_i32_0 : i32, i32
  }
  func.func @transform_5(%arg0: i32) -> (i32, i32) {
    %c0_i32 = arith.constant 0 : i32
    %c0_i32_0 = arith.constant 0 : i32
    %c0_i32_1 = arith.constant 0 : i32
    return %c0_i32, %c0_i32_0 : i32, i32
  }
  func.func @transform_6(%arg0: i32) -> (i32, i32) {
    %c0_i32 = arith.constant 0 : i32
    %c0_i32_0 = arith.constant 0 : i32
    %c0_i32_1 = arith.constant 0 : i32
    return %c0_i32, %c0_i32_0 : i32, i32
  }
  func.func @transform_7(%arg0: i32) -> (i32, i32) {
    %c0_i32 = arith.constant 0 : i32
    %c0_i32_0 = arith.constant 0 : i32
    return %arg0, %c0_i32 : i32, i32
  }
}

module attributes {stable_mosaic.version = 11 : i64} {
  func.func @_dmlp_kernel(%arg0: i32, %arg1: memref<128x32xf32, #tpu.memory_space<vmem>>, %arg2: memref<32x128xbf16, #tpu.memory_space<vmem>>, %arg3: memref<1x128xf32, #tpu.memory_space<vmem>>, %arg4: memref<128x64xbf16, #tpu.memory_space<vmem>>, %arg5: memref<1x64xf32, #tpu.memory_space<vmem>>, %arg6: memref<64x8xbf16, #tpu.memory_space<vmem>>, %arg7: memref<1x8xf32, #tpu.memory_space<vmem>>, %arg8: memref<128x8xf32, #tpu.memory_space<vmem>>) attributes {dimension_semantics = [#tpu.dimension_semantics<parallel>], iteration_bounds = array<i64: 1>, scalar_prefetch = 0 : i64, scratch_operands = 0 : i64, tpu.core_type = #tpu.core_type<tc>, window_params = [{transform_indices = @transform_0, window_bounds = array<i64: 128, 32>}, {pipeline_mode = #tpu.pipeline_mode<synchronous>, transform_indices = @transform_1, window_bounds = array<i64: 32, 128>}, {pipeline_mode = #tpu.pipeline_mode<synchronous>, transform_indices = @transform_2, window_bounds = array<i64: 1, 128>}, {pipeline_mode = #tpu.pipeline_mode<synchronous>, transform_indices = @transform_3, window_bounds = array<i64: 128, 64>}, {pipeline_mode = #tpu.pipeline_mode<synchronous>, transform_indices = @transform_4, window_bounds = array<i64: 1, 64>}, {pipeline_mode = #tpu.pipeline_mode<synchronous>, transform_indices = @transform_5, window_bounds = array<i64: 64, 8>}, {pipeline_mode = #tpu.pipeline_mode<synchronous>, transform_indices = @transform_6, window_bounds = array<i64: 1, 8>}, {transform_indices = @transform_7, window_bounds = array<i64: 128, 8>}]} {
    %c0 = arith.constant 0 : index
    %c0_0 = arith.constant 0 : index
    %0 = vector.load %arg1[%c0, %c0_0] : memref<128x32xf32, #tpu.memory_space<vmem>>, vector<128x32xf32>
    %1 = arith.truncf %0 : vector<128x32xf32> to vector<128x32xbf16>
    %c0_1 = arith.constant 0 : index
    %c0_2 = arith.constant 0 : index
    %2 = vector.load %arg2[%c0_1, %c0_2] : memref<32x128xbf16, #tpu.memory_space<vmem>>, vector<32x128xbf16>
    %cst = arith.constant dense<0.000000e+00> : vector<128x128xf32>
    %3 = tpu.matmul %1, %2, %cst {dimension_numbers = #tpu.dot_dimension_numbers<[1], [0], [0], [1], [0, 0, 1, 1], [], []>} : vector<128x32xbf16>, vector<32x128xbf16>, vector<128x128xf32> -> vector<128x128xf32>
    %c0_3 = arith.constant 0 : index
    %c0_4 = arith.constant 0 : index
    %4 = vector.load %arg3[%c0_3, %c0_4] : memref<1x128xf32, #tpu.memory_space<vmem>>, vector<1x128xf32>
    %5 = vector.broadcast %4 : vector<1x128xf32> to vector<128x128xf32>
    %6 = arith.addf %3, %5 : vector<128x128xf32>
    %cst_5 = arith.constant 0.000000e+00 : f32
    %7 = vector.broadcast %cst_5 : f32 to vector<128x128xf32>
    %8 = arith.maximumf %6, %7 : vector<128x128xf32>
    %9 = arith.truncf %8 : vector<128x128xf32> to vector<128x128xbf16>
    %c0_6 = arith.constant 0 : index
    %c0_7 = arith.constant 0 : index
    %10 = vector.load %arg4[%c0_6, %c0_7] : memref<128x64xbf16, #tpu.memory_space<vmem>>, vector<128x64xbf16>
    %cst_8 = arith.constant dense<0.000000e+00> : vector<128x64xf32>
    %11 = tpu.matmul %9, %10, %cst_8 {dimension_numbers = #tpu.dot_dimension_numbers<[1], [0], [0], [1], [0, 0, 1, 1], [], []>} : vector<128x128xbf16>, vector<128x64xbf16>, vector<128x64xf32> -> vector<128x64xf32>
    %c0_9 = arith.constant 0 : index
    %c0_10 = arith.constant 0 : index
    %12 = vector.load %arg5[%c0_9, %c0_10] : memref<1x64xf32, #tpu.memory_space<vmem>>, vector<1x64xf32>
    %13 = vector.broadcast %12 : vector<1x64xf32> to vector<128x64xf32>
    %14 = arith.addf %11, %13 : vector<128x64xf32>
    %cst_11 = arith.constant 0.000000e+00 : f32
    %15 = vector.broadcast %cst_11 : f32 to vector<128x64xf32>
    %16 = arith.maximumf %14, %15 : vector<128x64xf32>
    %17 = arith.truncf %16 : vector<128x64xf32> to vector<128x64xbf16>
    %c0_12 = arith.constant 0 : index
    %c0_13 = arith.constant 0 : index
    %18 = vector.load %arg6[%c0_12, %c0_13] : memref<64x8xbf16, #tpu.memory_space<vmem>>, vector<64x8xbf16>
    %cst_14 = arith.constant dense<0.000000e+00> : vector<128x8xf32>
    %19 = tpu.matmul %17, %18, %cst_14 {dimension_numbers = #tpu.dot_dimension_numbers<[1], [0], [0], [1], [0, 0, 1, 1], [], []>} : vector<128x64xbf16>, vector<64x8xbf16>, vector<128x8xf32> -> vector<128x8xf32>
    %c0_15 = arith.constant 0 : index
    %c0_16 = arith.constant 0 : index
    %20 = vector.load %arg7[%c0_15, %c0_16] : memref<1x8xf32, #tpu.memory_space<vmem>>, vector<1x8xf32>
    %21 = vector.broadcast %20 : vector<1x8xf32> to vector<128x8xf32>
    %22 = arith.addf %19, %21 : vector<128x8xf32>
    %c0_17 = arith.constant 0 : index
    %c0_18 = arith.constant 0 : index
    %23 = vector.load %arg8[%c0_17, %c0_18] : memref<128x8xf32, #tpu.memory_space<vmem>>, vector<128x8xf32>
    tpu.vector_store %arg8[%c0_17, %c0_18], %22 {strides = array<i32>} : memref<128x8xf32, #tpu.memory_space<vmem>>, vector<128x8xf32>,
    return
  }
  func.func @transform_0(%arg0: i32) -> (i32, i32) {
    %c0_i32 = arith.constant 0 : i32
    %c0_i32_0 = arith.constant 0 : i32
    return %arg0, %c0_i32 : i32, i32
  }
  func.func @transform_1(%arg0: i32) -> (i32, i32) {
    %c0_i32 = arith.constant 0 : i32
    %c0_i32_0 = arith.constant 0 : i32
    %c0_i32_1 = arith.constant 0 : i32
    return %c0_i32, %c0_i32_0 : i32, i32
  }
  func.func @transform_2(%arg0: i32) -> (i32, i32) {
    %c0_i32 = arith.constant 0 : i32
    %c0_i32_0 = arith.constant 0 : i32
    %c0_i32_1 = arith.constant 0 : i32
    return %c0_i32, %c0_i32_0 : i32, i32
  }
  func.func @transform_3(%arg0: i32) -> (i32, i32) {
    %c0_i32 = arith.constant 0 : i32
    %c0_i32_0 = arith.constant 0 : i32
    %c0_i32_1 = arith.constant 0 : i32
    return %c0_i32, %c0_i32_0 : i32, i32
  }
  func.func @transform_4(%arg0: i32) -> (i32, i32) {
    %c0_i32 = arith.constant 0 : i32
    %c0_i32_0 = arith.constant 0 : i32
    %c0_i32_1 = arith.constant 0 : i32
    return %c0_i32, %c0_i32_0 : i32, i32
  }
  func.func @transform_5(%arg0: i32) -> (i32, i32) {
    %c0_i32 = arith.constant 0 : i32
    %c0_i32_0 = arith.constant 0 : i32
    %c0_i32_1 = arith.constant 0 : i32
    return %c0_i32, %c0_i32_0 : i32, i32
  }
  func.func @transform_6(%arg0: i32) -> (i32, i32) {
    %c0_i32 = arith.constant 0 : i32
    %c0_i32_0 = arith.constant 0 : i32
    %c0_i32_1 = arith.constant 0 : i32
    return %c0_i32, %c0_i32_0 : i32, i32
  }
  func.func @transform_7(%arg0: i32) -> (i32, i32) {
    %c0_i32 = arith.constant 0 : i32
    %c0_i32_0 = arith.constant 0 : i32
    return %arg0, %c0_i32 : i32, i32
  }
}

</mosaic_0001>

<llo_original>
// kernel: tpu_custom_call.1
$region0: #{tpu_custom_call.1}
  #allocation0 [shape = 'u32[]', space=smem, size = 0x4, offset = 0x4, fixed_abs, tag = 'smem constant byte address 0x4 - core index']
  #allocation1 [shape = 'u32[144,128]{1,0:T(1,128)}', space=vmem, size = 0x12000, scoped, tag = 'internal scratch']
  %s0 = inlined_call_operand.vmem [shape: f32[128,32], index: 0, kind: input, shape index: {}]
  %s1 = inlined_call_operand.vmem [shape: bf16[32,128], index: 1, kind: input, shape index: {}]
  %s2 = inlined_call_operand.vmem [shape: f32[1,128], index: 2, kind: input, shape index: {}]
  %s3 = inlined_call_operand.vmem [shape: bf16[128,64], index: 3, kind: input, shape index: {}]
  %s4 = inlined_call_operand.vmem [shape: f32[1,64], index: 4, kind: input, shape index: {}]
  %s5 = inlined_call_operand.vmem [shape: bf16[64,8], index: 5, kind: input, shape index: {}]
  %s6 = inlined_call_operand.vmem [shape: f32[1,8], index: 6, kind: input, shape index: {}]
  %s7 = inlined_call_operand.vmem [shape: f32[128,8], index: 7, kind: output, shape index: {}]
  %s8 = sld [smem:[#allocation0]]
  $region38: #{tpu_custom_call.1} parent=0
    _
  %s10 = ssub.s32 1, %s8
  %s11 = scalar_select 0, %s10, %s8
  // Predicated region
  $region2: #{tpu_custom_call.1} parent=0 // pred_check
    _
  $region3: #{tpu_custom_call.1} parent=0 // pred_check_branch
    %13 = sbr.rel (0) target = $region5
  $region4: #{tpu_custom_call.1} parent=0 // pred_region
    _
  $region5: #{tpu_custom_call.1} parent=0 // pred_fallthru
    _
  // Predicated region
  $region6: #{tpu_custom_call.1} parent=0 // pred_check
    _
  $region7: #{tpu_custom_call.1} parent=0 // pred_check_branch
    %15 = sbr.rel (0) target = $region9
  $region8: #{tpu_custom_call.1} parent=0 // pred_region
    _
  $region9: #{tpu_custom_call.1} parent=0 // pred_fallthru
    _
  // Predicated region
  $region10: #{tpu_custom_call.1} parent=0 // pred_check
    _
  $region11: #{tpu_custom_call.1} parent=0 // pred_check_branch
    %17 = sbr.rel (0) target = $region13
  $region12: #{tpu_custom_call.1} parent=0 // pred_region
    _
  $region13: #{tpu_custom_call.1} parent=0 // pred_fallthru
    _
  // Predicated region
  $region14: #{tpu_custom_call.1} parent=0 // pred_check
    _
  $region15: #{tpu_custom_call.1} parent=0 // pred_check_branch
    %19 = sbr.rel (0) target = $region17
  $region16: #{tpu_custom_call.1} parent=0 // pred_region
    _
  $region17: #{tpu_custom_call.1} parent=0 // pred_fallthru
    _
  // Predicated region
  $region18: #{tpu_custom_call.1} parent=0 // pred_check
    _
  $region19: #{tpu_custom_call.1} parent=0 // pred_check_branch
    %21 = sbr.rel (0) target = $region21
  $region20: #{tpu_custom_call.1} parent=0 // pred_region
    _
  $region21: #{tpu_custom_call.1} parent=0 // pred_fallthru
    _
  // Predicated region
  $region22: #{tpu_custom_call.1} parent=0 // pred_check
    _
  $region23: #{tpu_custom_call.1} parent=0 // pred_check_branch
    %23 = sbr.rel (0) target = $region25
  $region24: #{tpu_custom_call.1} parent=0 // pred_region
    _
  $region25: #{tpu_custom_call.1} parent=0 // pred_fallthru
    _
  // Predicated region
  $region26: #{tpu_custom_call.1} parent=0 // pred_check
    _
  $region27: #{tpu_custom_call.1} parent=0 // pred_check_branch
    %25 = sbr.rel (0) target = $region29
  $region28: #{tpu_custom_call.1} parent=0 // pred_region
    _
  $region29: #{tpu_custom_call.1} parent=0 // pred_fallthru
    _
  %v27 = vld [vmem:[%s0] sm:$0xff]
  %v28 = vld [vmem:[%s0 + $0x8] sm:$0xff]
  %v29 = vld [vmem:[%s0 + $0x10] sm:$0xff]
  %v30 = vld [vmem:[%s0 + $0x18] sm:$0xff]
  %v31 = vld [vmem:[%s0 + $0x20] sm:$0xff]
  %v32 = vld [vmem:[%s0 + $0x28] sm:$0xff]
  %v33 = vld [vmem:[%s0 + $0x30] sm:$0xff]
  %v34 = vld [vmem:[%s0 + $0x38] sm:$0xff]
  %v35 = vld [vmem:[%s0 + $0x40] sm:$0xff]
  %v36 = vld [vmem:[%s0 + $0x48] sm:$0xff]
  %v37 = vld [vmem:[%s0 + $0x50] sm:$0xff]
  %v38 = vld [vmem:[%s0 + $0x58] sm:$0xff]
  %v39 = vld [vmem:[%s0 + $0x60] sm:$0xff]
  %v40 = vld [vmem:[%s0 + $0x68] sm:$0xff]
  %v41 = vld [vmem:[%s0 + $0x70] sm:$0xff]
  %v42 = vld [vmem:[%s0 + $0x78] sm:$0xff]
  %v43 = vpack.c.bf16 %v28, %v27
  %v44 = vpack.c.bf16 %v30, %v29
  %v45 = vpack.c.bf16 %v32, %v31
  %v46 = vpack.c.bf16 %v34, %v33
  %v47 = vpack.c.bf16 %v36, %v35
  %v48 = vpack.c.bf16 %v38, %v37
  %v49 = vpack.c.bf16 %v40, %v39
  %v50 = vpack.c.bf16 %v42, %v41
  %v51 = vld [vmem:[%s1] sm:$0xf]
  %v52 = vld [vmem:[%s1 + $0x4] sm:$0xf]
  %v53 = vld [vmem:[%s1 + $0x8] sm:$0xf]
  %v54 = vld [vmem:[%s1 + $0xc] sm:$0xf]
  %v55 = vld [vmem:[%s2] sm:$0x1]
  %v57 = vlaneseq
  %v58 = vshrl.u32 %v57, 7
  %v59 = vsub.s32 0, %v58
  %v60 = vrot.slane %v55, %v59
  %v66 = vunpack.c.l.b16 %v51
  %v67 = vunpack.c.l.b16 %v52
  %v68 = vunpack.c.l.b16 %v53
  %v69 = vunpack.c.l.b16 %v54
  %v70 = vpack.c.b16 %v67, %v66
  %v71 = vpack.c.b16 %v69, %v68
  %vm74 = vcmask 261120
  %v76 = vsel %vm74, %v43, 0
  %v79 = vsel %vm74, %v44, 0
  %v82 = vsel %vm74, %v45, 0
  %v85 = vsel %vm74, %v46, 0
  %v88 = vsel %vm74, %v47, 0
  %v91 = vsel %vm74, %v48, 0
  %v94 = vsel %vm74, %v49, 0
  %v97 = vsel %vm74, %v50, 0
  %99 = vmatprep.subr.bf16.mxu0 0
  %100 = vmatpush1.bf16.msra.mxu0 0
  %101 = vmatprep.subr.bf16.mxu0 0
  %102 = vmatpush1.bf16.msra.mxu0 0
  %103 = vmatprep.subr.bf16.mxu0 0
  %104 = vmatpush1.bf16.msra.mxu0 0
  %105 = vmatprep.subr.bf16.mxu0 0
  %106 = vmatpush1.bf16.msra.mxu0 0
  %107 = vmatprep.subr.bf16.mxu0 0
  %108 = vmatpush1.bf16.msra.mxu0 0
  %109 = vmatprep.subr.bf16.mxu0 0
  %110 = vmatpush1.bf16.msra.mxu0 0
  %111 = vmatprep.subr.bf16.mxu0 0
  %112 = vmatpush1.bf16.msra.mxu0 %v71
  %113 = vmatprep.subr.bf16.mxu0 0
  %114 = vmatpush1.bf16.msra.mxu0 %v70
  %115 = vmatprep.subr.bf16.mxu0 0
  %116 = vmatpush2.bf16.msra.mxu0 0
  %117 = vmatprep.subr.bf16.mxu0 0
  %118 = vmatpush2.bf16.msra.mxu0 0
  %119 = vmatprep.subr.bf16.mxu0 0
  %120 = vmatpush2.bf16.msra.mxu0 0
  %121 = vmatprep.subr.bf16.mxu0 0
  %122 = vmatpush2.bf16.msra.mxu0 0
  %123 = vmatprep.subr.bf16.mxu0 0
  %124 = vmatpush2.bf16.msra.mxu0 0
  %125 = vmatprep.subr.bf16.mxu0 0
  %126 = vmatpush2.bf16.msra.mxu0 0
  %127 = vmatprep.subr.bf16.mxu0 0
  %128 = vmatpush2.bf16.msra.mxu0 0
  %129 = vmatprep.subr.bf16.mxu0 0
  %130 = vmatpush2.bf16.msra.mxu0 0
  %131 = vmatprep.mubr.bf16.mxu0 0
  %132 = vmatmul.mubr.bf16.gmra.mxu0 %v76
  %v133 = vpop.f32.mrf.mxu0
  %v134 = vadd.f32 %v60, %v133
  %v135 = vpop.f32.mrf.mxu0
  %v136 = vpop.f32.mrf.mxu0
  %v137 = vadd.f32 %v60, %v136
  %v138 = vpop.f32.mrf.mxu0
  %139 = vmatprep.mubr.bf16.mxu0 0
  %140 = vmatmul.mubr.bf16.gmra.mxu0 %v79
  %v141 = vpop.f32.mrf.mxu0
  %v142 = vadd.f32 %v60, %v141
  %v143 = vpop.f32.mrf.mxu0
  %v144 = vpop.f32.mrf.mxu0
  %v145 = vadd.f32 %v60, %v144
  %v146 = vpop.f32.mrf.mxu0
  %147 = vmatprep.mubr.bf16.mxu0 0
  %148 = vmatmul.mubr.bf16.gmra.mxu0 %v82
  %v149 = vpop.f32.mrf.mxu0
  %v150 = vadd.f32 %v60, %v149
  %v151 = vpop.f32.mrf.mxu0
  %v152 = vpop.f32.mrf.mxu0
  %v153 = vadd.f32 %v60, %v152
  %v154 = vpop.f32.mrf.mxu0
  %155 = vmatprep.mubr.bf16.mxu0 0
  %156 = vmatmul.mubr.bf16.gmra.mxu0 %v85
  %v157 = vpop.f32.mrf.mxu0
  %v158 = vadd.f32 %v60, %v157
  %v159 = vpop.f32.mrf.mxu0
  %v160 = vpop.f32.mrf.mxu0
  %v161 = vadd.f32 %v60, %v160
  %v162 = vpop.f32.mrf.mxu0
  %163 = vmatprep.mubr.bf16.mxu0 0
  %164 = vmatmul.mubr.bf16.gmra.mxu0 %v88
  %v165 = vpop.f32.mrf.mxu0
  %v166 = vadd.f32 %v60, %v165
  %v167 = vpop.f32.mrf.mxu0
  %v168 = vpop.f32.mrf.mxu0
  %v169 = vadd.f32 %v60, %v168
  %v170 = vpop.f32.mrf.mxu0
  %171 = vmatprep.mubr.bf16.mxu0 0
  %172 = vmatmul.mubr.bf16.gmra.mxu0 %v91
  %v173 = vpop.f32.mrf.mxu0
  %v174 = vadd.f32 %v60, %v173
  %v175 = vpop.f32.mrf.mxu0
  %v176 = vpop.f32.mrf.mxu0
  %v177 = vadd.f32 %v60, %v176
  %v178 = vpop.f32.mrf.mxu0
  %179 = vmatprep.mubr.bf16.mxu0 0
  %180 = vmatmul.mubr.bf16.gmra.mxu0 %v94
  %v181 = vpop.f32.mrf.mxu0
  %v182 = vadd.f32 %v60, %v181
  %v183 = vpop.f32.mrf.mxu0
  %v184 = vpop.f32.mrf.mxu0
  %v185 = vadd.f32 %v60, %v184
  %v186 = vpop.f32.mrf.mxu0
  %187 = vmatprep.mubr.bf16.mxu0 0
  %188 = vmatmul.mubr.bf16.gmra.mxu0 %v97
  %v189 = vpop.f32.mrf.mxu0
  %v190 = vadd.f32 %v60, %v189
  %v191 = vpop.f32.mrf.mxu0
  %v192 = vpop.f32.mrf.mxu0
  %v193 = vadd.f32 %v60, %v192
  %v194 = vpop.f32.mrf.mxu0
  %195 = vdwg.mxu0
  %v196 = vmax.f32 %v134, 0.0
  %v197 = vmax.f32 %v137, 0.0
  %v198 = vmax.f32 %v142, 0.0
  %v199 = vmax.f32 %v145, 0.0
  %v200 = vmax.f32 %v150, 0.0
  %v201 = vmax.f32 %v153, 0.0
  %v202 = vmax.f32 %v158, 0.0
  %v203 = vmax.f32 %v161, 0.0
  %v204 = vmax.f32 %v166, 0.0
  %v205 = vmax.f32 %v169, 0.0
  %v206 = vmax.f32 %v174, 0.0
  %v207 = vmax.f32 %v177, 0.0
  %v208 = vmax.f32 %v182, 0.0
  %v209 = vmax.f32 %v185, 0.0
  %v210 = vmax.f32 %v190, 0.0
  %v211 = vmax.f32 %v193, 0.0
  %v212 = vpack.c.bf16 %v197, %v196
  %v213 = vpack.c.bf16 %v199, %v198
  %v214 = vpack.c.bf16 %v201, %v200
  %v215 = vpack.c.bf16 %v203, %v202
  %v216 = vpack.c.bf16 %v205, %v204
  %v217 = vpack.c.bf16 %v207, %v206
  %v218 = vpack.c.bf16 %v209, %v208
  %v219 = vpack.c.bf16 %v211, %v210
  %v220 = vld [vmem:[%s3] sm:$0xf]
  %v221 = vld [vmem:[%s3 + $0x4] sm:$0xf]
  %v222 = vld [vmem:[%s3 + $0x8] sm:$0xf]
  %v223 = vld [vmem:[%s3 + $0xc] sm:$0xf]
  %v224 = vld [vmem:[%s3 + $0x10] sm:$0xf]
  %v225 = vld [vmem:[%s3 + $0x14] sm:$0xf]
  %v226 = vld [vmem:[%s3 + $0x18] sm:$0xf]
  %v227 = vld [vmem:[%s3 + $0x1c] sm:$0xf]
  %v228 = vld [vmem:[%s3 + $0x20] sm:$0xf]
  %v229 = vld [vmem:[%s3 + $0x24] sm:$0xf]
  %v230 = vld [vmem:[%s3 + $0x28] sm:$0xf]
  %v231 = vld [vmem:[%s3 + $0x2c] sm:$0xf]
  %v232 = vld [vmem:[%s3 + $0x30] sm:$0xf]
  %v233 = vld [vmem:[%s3 + $0x34] sm:$0xf]
  %v234 = vld [vmem:[%s3 + $0x38] sm:$0xf]
  %v235 = vld [vmem:[%s3 + $0x3c] sm:$0xf]
  %v236 = vld [vmem:[%s4] sm:$0x1]
  %v238 = vlaneseq
  %v239 = vshrl.u32 %v238, 7
  %v240 = vsub.s32 0, %v239
  %v241 = vrot.slane %v236, %v240
  %v259 = vunpack.c.l.b16 %v220
  %v260 = vunpack.c.l.b16 %v221
  %v261 = vunpack.c.l.b16 %v222
  %v262 = vunpack.c.l.b16 %v223
  %v263 = vunpack.c.l.b16 %v224
  %v264 = vunpack.c.l.b16 %v225
  %v265 = vunpack.c.l.b16 %v226
  %v266 = vunpack.c.l.b16 %v227
  %v267 = vunpack.c.l.b16 %v228
  %v268 = vunpack.c.l.b16 %v229
  %v269 = vunpack.c.l.b16 %v230
  %v270 = vunpack.c.l.b16 %v231
  %v271 = vunpack.c.l.b16 %v232
  %v272 = vunpack.c.l.b16 %v233
  %v273 = vunpack.c.l.b16 %v234
  %v274 = vunpack.c.l.b16 %v235
  %v275 = vpack.c.b16 %v260, %v259
  %v276 = vpack.c.b16 %v262, %v261
  %v277 = vpack.c.b16 %v264, %v263
  %v278 = vpack.c.b16 %v266, %v265
  %v279 = vpack.c.b16 %v268, %v267
  %v280 = vpack.c.b16 %v270, %v269
  %v281 = vpack.c.b16 %v272, %v271
  %v282 = vpack.c.b16 %v274, %v273
  %291 = vmatprep.subr.bf16.mxu0 0
  %292 = vmatpush1.bf16.msra.mxu0 %v282
  %293 = vmatprep.subr.bf16.mxu0 0
  %294 = vmatpush1.bf16.msra.mxu0 %v281
  %295 = vmatprep.subr.bf16.mxu0 0
  %296 = vmatpush1.bf16.msra.mxu0 %v280
  %297 = vmatprep.subr.bf16.mxu0 0
  %298 = vmatpush1.bf16.msra.mxu0 %v279
  %299 = vmatprep.subr.bf16.mxu0 0
  %300 = vmatpush1.bf16.msra.mxu0 %v278
  %301 = vmatprep.subr.bf16.mxu0 0
  %302 = vmatpush1.bf16.msra.mxu0 %v277
  %303 = vmatprep.subr.bf16.mxu0 0
  %304 = vmatpush1.bf16.msra.mxu0 %v276
  %305 = vmatprep.subr.bf16.mxu0 0
  %306 = vmatpush1.bf16.msra.mxu0 %v275
  %307 = vmatprep.subr.bf16.mxu0 0
  %308 = vmatpush2.bf16.msra.mxu0 0
  %309 = vmatprep.subr.bf16.mxu0 0
  %310 = vmatpush2.bf16.msra.mxu0 0
  %311 = vmatprep.subr.bf16.mxu0 0
  %312 = vmatpush2.bf16.msra.mxu0 0
  %313 = vmatprep.subr.bf16.mxu0 0
  %314 = vmatpush2.bf16.msra.mxu0 0
  %315 = vmatprep.subr.bf16.mxu0 0
  %316 = vmatpush2.bf16.msra.mxu0 0
  %317 = vmatprep.subr.bf16.mxu0 0
  %318 = vmatpush2.bf16.msra.mxu0 0
  %319 = vmatprep.subr.bf16.mxu0 0
  %320 = vmatpush2.bf16.msra.mxu0 0
  %321 = vmatprep.subr.bf16.mxu0 0
  %322 = vmatpush2.bf16.msra.mxu0 0
  %323 = vmatprep.mubr.bf16.mxu0 0
  %324 = vmatmul.mubr.bf16.gmra.mxu0 %v212
  %v325 = vpop.f32.mrf.mxu0
  %v326 = vadd.f32 %v241, %v325
  %v327 = vpop.f32.mrf.mxu0
  %v328 = vpop.f32.mrf.mxu0
  %v329 = vadd.f32 %v241, %v328
  %v330 = vpop.f32.mrf.mxu0
  %331 = vmatprep.mubr.bf16.mxu0 0
  %332 = vmatmul.mubr.bf16.gmra.mxu0 %v213
  %v333 = vpop.f32.mrf.mxu0
  %v334 = vadd.f32 %v241, %v333
  %v335 = vpop.f32.mrf.mxu0
  %v336 = vpop.f32.mrf.mxu0
  %v337 = vadd.f32 %v241, %v336
  %v338 = vpop.f32.mrf.mxu0
  %339 = vmatprep.mubr.bf16.mxu0 0
  %340 = vmatmul.mubr.bf16.gmra.mxu0 %v214
  %v341 = vpop.f32.mrf.mxu0
  %v342 = vadd.f32 %v241, %v341
  %v343 = vpop.f32.mrf.mxu0
  %v344 = vpop.f32.mrf.mxu0
  %v345 = vadd.f32 %v241, %v344
  %v346 = vpop.f32.mrf.mxu0
  %347 = vmatprep.mubr.bf16.mxu0 0
  %348 = vmatmul.mubr.bf16.gmra.mxu0 %v215
  %v349 = vpop.f32.mrf.mxu0
  %v350 = vadd.f32 %v241, %v349
  %v351 = vpop.f32.mrf.mxu0
  %v352 = vpop.f32.mrf.mxu0
  %v353 = vadd.f32 %v241, %v352
  %v354 = vpop.f32.mrf.mxu0
  %355 = vmatprep.mubr.bf16.mxu0 0
  %356 = vmatmul.mubr.bf16.gmra.mxu0 %v216
  %v357 = vpop.f32.mrf.mxu0
  %v358 = vadd.f32 %v241, %v357
  %v359 = vpop.f32.mrf.mxu0
  %v360 = vpop.f32.mrf.mxu0
  %v361 = vadd.f32 %v241, %v360
  %v362 = vpop.f32.mrf.mxu0
  %363 = vmatprep.mubr.bf16.mxu0 0
  %364 = vmatmul.mubr.bf16.gmra.mxu0 %v217
  %v365 = vpop.f32.mrf.mxu0
  %v366 = vadd.f32 %v241, %v365
  %v367 = vpop.f32.mrf.mxu0
  %v368 = vpop.f32.mrf.mxu0
  %v369 = vadd.f32 %v241, %v368
  %v370 = vpop.f32.mrf.mxu0
  %371 = vmatprep.mubr.bf16.mxu0 0
  %372 = vmatmul.mubr.bf16.gmra.mxu0 %v218
  %v373 = vpop.f32.mrf.mxu0
  %v374 = vadd.f32 %v241, %v373
  %v375 = vpop.f32.mrf.mxu0
  %v376 = vpop.f32.mrf.mxu0
  %v377 = vadd.f32 %v241, %v376
  %v378 = vpop.f32.mrf.mxu0
  %379 = vmatprep.mubr.bf16.mxu0 0
  %380 = vmatmul.mubr.bf16.gmra.mxu0 %v219
  %v381 = vpop.f32.mrf.mxu0
  %v382 = vadd.f32 %v241, %v381
  %v383 = vpop.f32.mrf.mxu0
  %v384 = vpop.f32.mrf.mxu0
  %v385 = vadd.f32 %v241, %v384
  %v386 = vpop.f32.mrf.mxu0
  %387 = vdwg.mxu0
  %v388 = vmax.f32 %v326, 0.0
  %v389 = vmax.f32 %v329, 0.0
  %v390 = vmax.f32 %v334, 0.0
  %v391 = vmax.f32 %v337, 0.0
  %v392 = vmax.f32 %v342, 0.0
  %v393 = vmax.f32 %v345, 0.0
  %v394 = vmax.f32 %v350, 0.0
  %v395 = vmax.f32 %v353, 0.0
  %v396 = vmax.f32 %v358, 0.0
  %v397 = vmax.f32 %v361, 0.0
  %v398 = vmax.f32 %v366, 0.0
  %v399 = vmax.f32 %v369, 0.0
  %v400 = vmax.f32 %v374, 0.0
  %v401 = vmax.f32 %v377, 0.0
  %v402 = vmax.f32 %v382, 0.0
  %v403 = vmax.f32 %v385, 0.0
  %v404 = vpack.c.bf16 %v389, %v388
  %v405 = vpack.c.bf16 %v391, %v390
  %v406 = vpack.c.bf16 %v393, %v392
  %v407 = vpack.c.bf16 %v395, %v394
  %v408 = vpack.c.bf16 %v397, %v396
  %v409 = vpack.c.bf16 %v399, %v398
  %v410 = vpack.c.bf16 %v401, %v400
  %v411 = vpack.c.bf16 %v403, %v402
  %v412 = vld [vmem:[%s5] sm:$0xf]
  %v413 = vld [vmem:[%s5 + $0x4] sm:$0xf]
  %v414 = vld [vmem:[%s5 + $0x8] sm:$0xf]
  %v415 = vld [vmem:[%s5 + $0xc] sm:$0xf]
  %v416 = vld [vmem:[%s5 + $0x10] sm:$0xf]
  %v417 = vld [vmem:[%s5 + $0x14] sm:$0xf]
  %v418 = vld [vmem:[%s5 + $0x18] sm:$0xf]
  %v419 = vld [vmem:[%s5 + $0x1c] sm:$0xf]
  %v420 = vld [vmem:[%s6] sm:$0x1]
  %v422 = vlaneseq
  %v423 = vshrl.u32 %v422, 7
  %v424 = vsub.s32 0, %v423
  %v425 = vrot.slane %v420, %v424
  %v435 = vunpack.c.l.b16 %v412
  %v436 = vunpack.c.l.b16 %v413
  %v437 = vunpack.c.l.b16 %v414
  %v438 = vunpack.c.l.b16 %v415
  %v439 = vunpack.c.l.b16 %v416
  %v440 = vunpack.c.l.b16 %v417
  %v441 = vunpack.c.l.b16 %v418
  %v442 = vunpack.c.l.b16 %v419
  %v443 = vpack.c.b16 %v436, %v435
  %v444 = vpack.c.b16 %v438, %v437
  %v445 = vpack.c.b16 %v440, %v439
  %v446 = vpack.c.b16 %v442, %v441
  %vm451 = vcmask 523264
  %v453 = vsel %vm451, %v404, 0
  %v456 = vsel %vm451, %v405, 0
  %v459 = vsel %vm451, %v406, 0
  %v462 = vsel %vm451, %v407, 0
  %v465 = vsel %vm451, %v408, 0
  %v468 = vsel %vm451, %v409, 0
  %v471 = vsel %vm451, %v410, 0
  %v474 = vsel %vm451, %v411, 0
  %476 = vmatprep.subr.bf16.mxu0 0
  %477 = vmatpush1.bf16.msra.mxu0 0
  %478 = vmatprep.subr.bf16.mxu0 0
  %479 = vmatpush1.bf16.msra.mxu0 0
  %480 = vmatprep.subr.bf16.mxu0 0
  %481 = vmatpush1.bf16.msra.mxu0 0
  %482 = vmatprep.subr.bf16.mxu0 0
  %483 = vmatpush1.bf16.msra.mxu0 0
  %484 = vmatprep.subr.bf16.mxu0 0
  %485 = vmatpush1.bf16.msra.mxu0 %v446
  %486 = vmatprep.subr.bf16.mxu0 0
  %487 = vmatpush1.bf16.msra.mxu0 %v445
  %488 = vmatprep.subr.bf16.mxu0 0
  %489 = vmatpush1.bf16.msra.mxu0 %v444
  %490 = vmatprep.subr.bf16.mxu0 0
  %491 = vmatpush1.bf16.msra.mxu0 %v443
  %492 = vmatprep.subr.bf16.mxu0 0
  %493 = vmatpush2.bf16.msra.mxu0 0
  %494 = vmatprep.subr.bf16.mxu0 0
  %495 = vmatpush2.bf16.msra.mxu0 0
  %496 = vmatprep.subr.bf16.mxu0 0
  %497 = vmatpush2.bf16.msra.mxu0 0
  %498 = vmatprep.subr.bf16.mxu0 0
  %499 = vmatpush2.bf16.msra.mxu0 0
  %500 = vmatprep.subr.bf16.mxu0 0
  %501 = vmatpush2.bf16.msra.mxu0 0
  %502 = vmatprep.subr.bf16.mxu0 0
  %503 = vmatpush2.bf16.msra.mxu0 0
  %504 = vmatprep.subr.bf16.mxu0 0
  %505 = vmatpush2.bf16.msra.mxu0 0
  %506 = vmatprep.subr.bf16.mxu0 0
  %507 = vmatpush2.bf16.msra.mxu0 0
  %508 = vmatprep.mubr.bf16.mxu0 0
  %509 = vmatmul.mubr.bf16.gmra.mxu0 %v453
  %v510 = vpop.f32.mrf.mxu0
  %v511 = vadd.f32 %v425, %v510
  %v512 = vpop.f32.mrf.mxu0
  %v513 = vpop.f32.mrf.mxu0
  %v514 = vadd.f32 %v425, %v513
  %v515 = vpop.f32.mrf.mxu0
  %516 = vmatprep.mubr.bf16.mxu0 0
  %517 = vmatmul.mubr.bf16.gmra.mxu0 %v456
  %v518 = vpop.f32.mrf.mxu0
  %v519 = vadd.f32 %v425, %v518
  %v520 = vpop.f32.mrf.mxu0
  %v521 = vpop.f32.mrf.mxu0
  %v522 = vadd.f32 %v425, %v521
  %v523 = vpop.f32.mrf.mxu0
  %524 = vmatprep.mubr.bf16.mxu0 0
  %525 = vmatmul.mubr.bf16.gmra.mxu0 %v459
  %v526 = vpop.f32.mrf.mxu0
  %v527 = vadd.f32 %v425, %v526
  %v528 = vpop.f32.mrf.mxu0
  %v529 = vpop.f32.mrf.mxu0
  %v530 = vadd.f32 %v425, %v529
  %v531 = vpop.f32.mrf.mxu0
  %532 = vmatprep.mubr.bf16.mxu0 0
  %533 = vmatmul.mubr.bf16.gmra.mxu0 %v462
  %v534 = vpop.f32.mrf.mxu0
  %v535 = vadd.f32 %v425, %v534
  %v536 = vpop.f32.mrf.mxu0
  %v537 = vpop.f32.mrf.mxu0
  %v538 = vadd.f32 %v425, %v537
  %v539 = vpop.f32.mrf.mxu0
  %540 = vmatprep.mubr.bf16.mxu0 0
  %541 = vmatmul.mubr.bf16.gmra.mxu0 %v465
  %v542 = vpop.f32.mrf.mxu0
  %v543 = vadd.f32 %v425, %v542
  %v544 = vpop.f32.mrf.mxu0
  %v545 = vpop.f32.mrf.mxu0
  %v546 = vadd.f32 %v425, %v545
  %v547 = vpop.f32.mrf.mxu0
  %548 = vmatprep.mubr.bf16.mxu0 0
  %549 = vmatmul.mubr.bf16.gmra.mxu0 %v468
  %v550 = vpop.f32.mrf.mxu0
  %v551 = vadd.f32 %v425, %v550
  %v552 = vpop.f32.mrf.mxu0
  %v553 = vpop.f32.mrf.mxu0
  %v554 = vadd.f32 %v425, %v553
  %v555 = vpop.f32.mrf.mxu0
  %556 = vmatprep.mubr.bf16.mxu0 0
  %557 = vmatmul.mubr.bf16.gmra.mxu0 %v471
  %v558 = vpop.f32.mrf.mxu0
  %v559 = vadd.f32 %v425, %v558
  %v560 = vpop.f32.mrf.mxu0
  %v561 = vpop.f32.mrf.mxu0
  %v562 = vadd.f32 %v425, %v561
  %v563 = vpop.f32.mrf.mxu0
  %564 = vmatprep.mubr.bf16.mxu0 0
  %565 = vmatmul.mubr.bf16.gmra.mxu0 %v474
  %v566 = vpop.f32.mrf.mxu0
  %v567 = vadd.f32 %v425, %v566
  %v568 = vpop.f32.mrf.mxu0
  %v569 = vpop.f32.mrf.mxu0
  %v570 = vadd.f32 %v425, %v569
  %v571 = vpop.f32.mrf.mxu0
  %572 = vdwg.mxu0
  %vm573 = vcmask 64512
  %574 = vst.msk [vmem:[%s7] sm:$0xff] %vm573, %v511
  %575 = vst.msk [vmem:[%s7 + $0x8] sm:$0xff] %vm573, %v514
  %576 = vst.msk [vmem:[%s7 + $0x10] sm:$0xff] %vm573, %v519
  %577 = vst.msk [vmem:[%s7 + $0x18] sm:$0xff] %vm573, %v522
  %578 = vst.msk [vmem:[%s7 + $0x20] sm:$0xff] %vm573, %v527
  %579 = vst.msk [vmem:[%s7 + $0x28] sm:$0xff] %vm573, %v530
  %580 = vst.msk [vmem:[%s7 + $0x30] sm:$0xff] %vm573, %v535
  %581 = vst.msk [vmem:[%s7 + $0x38] sm:$0xff] %vm573, %v538
  %582 = vst.msk [vmem:[%s7 + $0x40] sm:$0xff] %vm573, %v543
  %583 = vst.msk [vmem:[%s7 + $0x48] sm:$0xff] %vm573, %v546
  %584 = vst.msk [vmem:[%s7 + $0x50] sm:$0xff] %vm573, %v551
  %585 = vst.msk [vmem:[%s7 + $0x58] sm:$0xff] %vm573, %v554
  %586 = vst.msk [vmem:[%s7 + $0x60] sm:$0xff] %vm573, %v559
  %587 = vst.msk [vmem:[%s7 + $0x68] sm:$0xff] %vm573, %v562
  %588 = vst.msk [vmem:[%s7 + $0x70] sm:$0xff] %vm573, %v567
  %589 = vst.msk [vmem:[%s7 + $0x78] sm:$0xff] %vm573, %v570
  // Predicated region
  $region30: #{tpu_custom_call.1} parent=0 // pred_check
    _
  $region31: #{tpu_custom_call.1} parent=0 // pred_check_branch
    %591 = sbr.rel (0) target = $region33
  $region32: #{tpu_custom_call.1} parent=0 // pred_region
    _
  $region33: #{tpu_custom_call.1} parent=0 // pred_fallthru
    _
  // Predicated region
  $region34: #{tpu_custom_call.1} parent=0 // pred_check
    _
  $region35: #{tpu_custom_call.1} parent=0 // pred_check_branch
    %593 = sbr.rel (0) target = $region37
  $region36: #{tpu_custom_call.1} parent=0 // pred_region
    _
  $region37: #{tpu_custom_call.1} parent=0 // pred_fallthru
    _

// kernel: tpu_custom_call.1
$region0: #{tpu_custom_call.1}
  #allocation0 [shape = 'u32[]', space=smem, size = 0x4, offset = 0x4, fixed_abs, tag = 'smem constant byte address 0x4 - core index']
  #allocation1 [shape = 'u32[144,128]{1,0:T(1,128)}', space=vmem, size = 0x12000, scoped, tag = 'internal scratch']
  %s0 = inlined_call_operand.vmem [shape: f32[128,32], index: 0, kind: input, shape index: {}]
  %s1 = inlined_call_operand.vmem [shape: bf16[32,128], index: 1, kind: input, shape index: {}]
  %s2 = inlined_call_operand.vmem [shape: f32[1,128], index: 2, kind: input, shape index: {}]
  %s3 = inlined_call_operand.vmem [shape: bf16[128,64], index: 3, kind: input, shape index: {}]
  %s4 = inlined_call_operand.vmem [shape: f32[1,64], index: 4, kind: input, shape index: {}]
  %s5 = inlined_call_operand.vmem [shape: bf16[64,8], index: 5, kind: input, shape index: {}]
  %s6 = inlined_call_operand.vmem [shape: f32[1,8], index: 6, kind: input, shape index: {}]
  %s7 = inlined_call_operand.vmem [shape: f32[128,8], index: 7, kind: output, shape index: {}]
  %s8 = sld [smem:[#allocation0]]
  $region38: #{tpu_custom_call.1} parent=0
    _
  %s10 = ssub.s32 1, %s8
  %s11 = scalar_select 0, %s10, %s8
  // Predicated region
  $region2: #{tpu_custom_call.1} parent=0 // pred_check
    _
  $region3: #{tpu_custom_call.1} parent=0 // pred_check_branch
    %13 = sbr.rel (0) target = $region5
  $region4: #{tpu_custom_call.1} parent=0 // pred_region
    _
  $region5: #{tpu_custom_call.1} parent=0 // pred_fallthru
    _
  // Predicated region
  $region6: #{tpu_custom_call.1} parent=0 // pred_check
    _
  $region7: #{tpu_custom_call.1} parent=0 // pred_check_branch
    %15 = sbr.rel (0) target = $region9
  $region8: #{tpu_custom_call.1} parent=0 // pred_region
    _
  $region9: #{tpu_custom_call.1} parent=0 // pred_fallthru
    _
  // Predicated region
  $region10: #{tpu_custom_call.1} parent=0 // pred_check
    _
  $region11: #{tpu_custom_call.1} parent=0 // pred_check_branch
    %17 = sbr.rel (0) target = $region13
  $region12: #{tpu_custom_call.1} parent=0 // pred_region
    _
  $region13: #{tpu_custom_call.1} parent=0 // pred_fallthru
    _
  // Predicated region
  $region14: #{tpu_custom_call.1} parent=0 // pred_check
    _
  $region15: #{tpu_custom_call.1} parent=0 // pred_check_branch
    %19 = sbr.rel (0) target = $region17
  $region16: #{tpu_custom_call.1} parent=0 // pred_region
    _
  $region17: #{tpu_custom_call.1} parent=0 // pred_fallthru
    _
  // Predicated region
  $region18: #{tpu_custom_call.1} parent=0 // pred_check
    _
  $region19: #{tpu_custom_call.1} parent=0 // pred_check_branch
    %21 = sbr.rel (0) target = $region21
  $region20: #{tpu_custom_call.1} parent=0 // pred_region
    _
  $region21: #{tpu_custom_call.1} parent=0 // pred_fallthru
    _
  // Predicated region
  $region22: #{tpu_custom_call.1} parent=0 // pred_check
    _
  $region23: #{tpu_custom_call.1} parent=0 // pred_check_branch
    %23 = sbr.rel (0) target = $region25
  $region24: #{tpu_custom_call.1} parent=0 // pred_region
    _
  $region25: #{tpu_custom_call.1} parent=0 // pred_fallthru
    _
  // Predicated region
  $region26: #{tpu_custom_call.1} parent=0 // pred_check
    _
  $region27: #{tpu_custom_call.1} parent=0 // pred_check_branch
    %25 = sbr.rel (0) target = $region29
  $region28: #{tpu_custom_call.1} parent=0 // pred_region
    _
  $region29: #{tpu_custom_call.1} parent=0 // pred_fallthru
    _
  %v27 = vld [vmem:[%s0] sm:$0xff]
  %v28 = vld [vmem:[%s0 + $0x8] sm:$0xff]
  %v29 = vld [vmem:[%s0 + $0x10] sm:$0xff]
  %v30 = vld [vmem:[%s0 + $0x18] sm:$0xff]
  %v31 = vld [vmem:[%s0 + $0x20] sm:$0xff]
  %v32 = vld [vmem:[%s0 + $0x28] sm:$0xff]
  %v33 = vld [vmem:[%s0 + $0x30] sm:$0xff]
  %v34 = vld [vmem:[%s0 + $0x38] sm:$0xff]
  %v35 = vld [vmem:[%s0 + $0x40] sm:$0xff]
  %v36 = vld [vmem:[%s0 + $0x48] sm:$0xff]
  %v37 = vld [vmem:[%s0 + $0x50] sm:$0xff]
  %v38 = vld [vmem:[%s0 + $0x58] sm:$0xff]
  %v39 = vld [vmem:[%s0 + $0x60] sm:$0xff]
  %v40 = vld [vmem:[%s0 + $0x68] sm:$0xff]
  %v41 = vld [vmem:[%s0 + $0x70] sm:$0xff]
  %v42 = vld [vmem:[%s0 + $0x78] sm:$0xff]
  %v43 = vpack.c.bf16 %v28, %v27
  %v44 = vpack.c.bf16 %v30, %v29
  %v45 = vpack.c.bf16 %v32, %v31
  %v46 = vpack.c.bf16 %v34, %v33
  %v47 = vpack.c.bf16 %v36, %v35
  %v48 = vpack.c.bf16 %v38, %v37
  %v49 = vpack.c.bf16 %v40, %v39
  %v50 = vpack.c.bf16 %v42, %v41
  %v51 = vld [vmem:[%s1] sm:$0xf]
  %v52 = vld [vmem:[%s1 + $0x4] sm:$0xf]
  %v53 = vld [vmem:[%s1 + $0x8] sm:$0xf]
  %v54 = vld [vmem:[%s1 + $0xc] sm:$0xf]
  %v55 = vld [vmem:[%s2] sm:$0x1]
  %v57 = vlaneseq
  %v58 = vshrl.u32 %v57, 7
  %v59 = vsub.s32 0, %v58
  %v60 = vrot.slane %v55, %v59
  %v66 = vunpack.c.l.b16 %v51
  %v67 = vunpack.c.l.b16 %v52
  %v68 = vunpack.c.l.b16 %v53
  %v69 = vunpack.c.l.b16 %v54
  %v70 = vpack.c.b16 %v67, %v66
  %v71 = vpack.c.b16 %v69, %v68
  %vm74 = vcmask 261120
  %v76 = vsel %vm74, %v43, 0
  %v79 = vsel %vm74, %v44, 0
  %v82 = vsel %vm74, %v45, 0
  %v85 = vsel %vm74, %v46, 0
  %v88 = vsel %vm74, %v47, 0
  %v91 = vsel %vm74, %v48, 0
  %v94 = vsel %vm74, %v49, 0
  %v97 = vsel %vm74, %v50, 0
  %99 = vmatprep.subr.bf16.mxu0 0
  %100 = vmatpush1.bf16.msra.mxu0 0
  %101 = vmatprep.subr.bf16.mxu0 0
  %102 = vmatpush1.bf16.msra.mxu0 0
  %103 = vmatprep.subr.bf16.mxu0 0
  %104 = vmatpush1.bf16.msra.mxu0 0
  %105 = vmatprep.subr.bf16.mxu0 0
  %106 = vmatpush1.bf16.msra.mxu0 0
  %107 = vmatprep.subr.bf16.mxu0 0
  %108 = vmatpush1.bf16.msra.mxu0 0
  %109 = vmatprep.subr.bf16.mxu0 0
  %110 = vmatpush1.bf16.msra.mxu0 0
  %111 = vmatprep.subr.bf16.mxu0 0
  %112 = vmatpush1.bf16.msra.mxu0 %v71
  %113 = vmatprep.subr.bf16.mxu0 0
  %114 = vmatpush1.bf16.msra.mxu0 %v70
  %115 = vmatprep.subr.bf16.mxu0 0
  %116 = vmatpush2.bf16.msra.mxu0 0
  %117 = vmatprep.subr.bf16.mxu0 0
  %118 = vmatpush2.bf16.msra.mxu0 0
  %119 = vmatprep.subr.bf16.mxu0 0
  %120 = vmatpush2.bf16.msra.mxu0 0
  %121 = vmatprep.subr.bf16.mxu0 0
  %122 = vmatpush2.bf16.msra.mxu0 0
  %123 = vmatprep.subr.bf16.mxu0 0
  %124 = vmatpush2.bf16.msra.mxu0 0
  %125 = vmatprep.subr.bf16.mxu0 0
  %126 = vmatpush2.bf16.msra.mxu0 0
  %127 = vmatprep.subr.bf16.mxu0 0
  %128 = vmatpush2.bf16.msra.mxu0 0
  %129 = vmatprep.subr.bf16.mxu0 0
  %130 = vmatpush2.bf16.msra.mxu0 0
  %131 = vmatprep.mubr.bf16.mxu0 0
  %132 = vmatmul.mubr.bf16.gmra.mxu0 %v76
  %v133 = vpop.f32.mrf.mxu0
  %v134 = vadd.f32 %v60, %v133
  %v135 = vpop.f32.mrf.mxu0
  %v136 = vpop.f32.mrf.mxu0
  %v137 = vadd.f32 %v60, %v136
  %v138 = vpop.f32.mrf.mxu0
  %139 = vmatprep.mubr.bf16.mxu0 0
  %140 = vmatmul.mubr.bf16.gmra.mxu0 %v79
  %v141 = vpop.f32.mrf.mxu0
  %v142 = vadd.f32 %v60, %v141
  %v143 = vpop.f32.mrf.mxu0
  %v144 = vpop.f32.mrf.mxu0
  %v145 = vadd.f32 %v60, %v144
  %v146 = vpop.f32.mrf.mxu0
  %147 = vmatprep.mubr.bf16.mxu0 0
  %148 = vmatmul.mubr.bf16.gmra.mxu0 %v82
  %v149 = vpop.f32.mrf.mxu0
  %v150 = vadd.f32 %v60, %v149
  %v151 = vpop.f32.mrf.mxu0
  %v152 = vpop.f32.mrf.mxu0
  %v153 = vadd.f32 %v60, %v152
  %v154 = vpop.f32.mrf.mxu0
  %155 = vmatprep.mubr.bf16.mxu0 0
  %156 = vmatmul.mubr.bf16.gmra.mxu0 %v85
  %v157 = vpop.f32.mrf.mxu0
  %v158 = vadd.f32 %v60, %v157
  %v159 = vpop.f32.mrf.mxu0
  %v160 = vpop.f32.mrf.mxu0
  %v161 = vadd.f32 %v60, %v160
  %v162 = vpop.f32.mrf.mxu0
  %163 = vmatprep.mubr.bf16.mxu0 0
  %164 = vmatmul.mubr.bf16.gmra.mxu0 %v88
  %v165 = vpop.f32.mrf.mxu0
  %v166 = vadd.f32 %v60, %v165
  %v167 = vpop.f32.mrf.mxu0
  %v168 = vpop.f32.mrf.mxu0
  %v169 = vadd.f32 %v60, %v168
  %v170 = vpop.f32.mrf.mxu0
  %171 = vmatprep.mubr.bf16.mxu0 0
  %172 = vmatmul.mubr.bf16.gmra.mxu0 %v91
  %v173 = vpop.f32.mrf.mxu0
  %v174 = vadd.f32 %v60, %v173
  %v175 = vpop.f32.mrf.mxu0
  %v176 = vpop.f32.mrf.mxu0
  %v177 = vadd.f32 %v60, %v176
  %v178 = vpop.f32.mrf.mxu0
  %179 = vmatprep.mubr.bf16.mxu0 0
  %180 = vmatmul.mubr.bf16.gmra.mxu0 %v94
  %v181 = vpop.f32.mrf.mxu0
  %v182 = vadd.f32 %v60, %v181
  %v183 = vpop.f32.mrf.mxu0
  %v184 = vpop.f32.mrf.mxu0
  %v185 = vadd.f32 %v60, %v184
  %v186 = vpop.f32.mrf.mxu0
  %187 = vmatprep.mubr.bf16.mxu0 0
  %188 = vmatmul.mubr.bf16.gmra.mxu0 %v97
  %v189 = vpop.f32.mrf.mxu0
  %v190 = vadd.f32 %v60, %v189
  %v191 = vpop.f32.mrf.mxu0
  %v192 = vpop.f32.mrf.mxu0
  %v193 = vadd.f32 %v60, %v192
  %v194 = vpop.f32.mrf.mxu0
  %195 = vdwg.mxu0
  %v196 = vmax.f32 %v134, 0.0
  %v197 = vmax.f32 %v137, 0.0
  %v198 = vmax.f32 %v142, 0.0
  %v199 = vmax.f32 %v145, 0.0
  %v200 = vmax.f32 %v150, 0.0
  %v201 = vmax.f32 %v153, 0.0
  %v202 = vmax.f32 %v158, 0.0
  %v203 = vmax.f32 %v161, 0.0
  %v204 = vmax.f32 %v166, 0.0
  %v205 = vmax.f32 %v169, 0.0
  %v206 = vmax.f32 %v174, 0.0
  %v207 = vmax.f32 %v177, 0.0
  %v208 = vmax.f32 %v182, 0.0
  %v209 = vmax.f32 %v185, 0.0
  %v210 = vmax.f32 %v190, 0.0
  %v211 = vmax.f32 %v193, 0.0
  %v212 = vpack.c.bf16 %v197, %v196
  %v213 = vpack.c.bf16 %v199, %v198
  %v214 = vpack.c.bf16 %v201, %v200
  %v215 = vpack.c.bf16 %v203, %v202
  %v216 = vpack.c.bf16 %v205, %v204
  %v217 = vpack.c.bf16 %v207, %v206
  %v218 = vpack.c.bf16 %v209, %v208
  %v219 = vpack.c.bf16 %v211, %v210
  %v220 = vld [vmem:[%s3] sm:$0xf]
  %v221 = vld [vmem:[%s3 + $0x4] sm:$0xf]
  %v222 = vld [vmem:[%s3 + $0x8] sm:$0xf]
  %v223 = vld [vmem:[%s3 + $0xc] sm:$0xf]
  %v224 = vld [vmem:[%s3 + $0x10] sm:$0xf]
  %v225 = vld [vmem:[%s3 + $0x14] sm:$0xf]
  %v226 = vld [vmem:[%s3 + $0x18] sm:$0xf]
  %v227 = vld [vmem:[%s3 + $0x1c] sm:$0xf]
  %v228 = vld [vmem:[%s3 + $0x20] sm:$0xf]
  %v229 = vld [vmem:[%s3 + $0x24] sm:$0xf]
  %v230 = vld [vmem:[%s3 + $0x28] sm:$0xf]
  %v231 = vld [vmem:[%s3 + $0x2c] sm:$0xf]
  %v232 = vld [vmem:[%s3 + $0x30] sm:$0xf]
  %v233 = vld [vmem:[%s3 + $0x34] sm:$0xf]
  %v234 = vld [vmem:[%s3 + $0x38] sm:$0xf]
  %v235 = vld [vmem:[%s3 + $0x3c] sm:$0xf]
  %v236 = vld [vmem:[%s4] sm:$0x1]
  %v238 = vlaneseq
  %v239 = vshrl.u32 %v238, 7
  %v240 = vsub.s32 0, %v239
  %v241 = vrot.slane %v236, %v240
  %v259 = vunpack.c.l.b16 %v220
  %v260 = vunpack.c.l.b16 %v221
  %v261 = vunpack.c.l.b16 %v222
  %v262 = vunpack.c.l.b16 %v223
  %v263 = vunpack.c.l.b16 %v224
  %v264 = vunpack.c.l.b16 %v225
  %v265 = vunpack.c.l.b16 %v226
  %v266 = vunpack.c.l.b16 %v227
  %v267 = vunpack.c.l.b16 %v228
  %v268 = vunpack.c.l.b16 %v229
  %v269 = vunpack.c.l.b16 %v230
  %v270 = vunpack.c.l.b16 %v231
  %v271 = vunpack.c.l.b16 %v232
  %v272 = vunpack.c.l.b16 %v233
  %v273 = vunpack.c.l.b16 %v234
  %v274 = vunpack.c.l.b16 %v235
  %v275 = vpack.c.b16 %v260, %v259
  %v276 = vpack.c.b16 %v262, %v261
  %v277 = vpack.c.b16 %v264, %v263
  %v278 = vpack.c.b16 %v266, %v265
  %v279 = vpack.c.b16 %v268, %v267
  %v280 = vpack.c.b16 %v270, %v269
  %v281 = vpack.c.b16 %v272, %v271
  %v282 = vpack.c.b16 %v274, %v273
  %291 = vmatprep.subr.bf16.mxu0 0
  %292 = vmatpush1.bf16.msra.mxu0 %v282
  %293 = vmatprep.subr.bf16.mxu0 0
  %294 = vmatpush1.bf16.msra.mxu0 %v281
  %295 = vmatprep.subr.bf16.mxu0 0
  %296 = vmatpush1.bf16.msra.mxu0 %v280
  %297 = vmatprep.subr.bf16.mxu0 0
  %298 = vmatpush1.bf16.msra.mxu0 %v279
  %299 = vmatprep.subr.bf16.mxu0 0
  %300 = vmatpush1.bf16.msra.mxu0 %v278
  %301 = vmatprep.subr.bf16.mxu0 0
  %302 = vmatpush1.bf16.msra.mxu0 %v277
  %303 = vmatprep.subr.bf16.mxu0 0
  %304 = vmatpush1.bf16.msra.mxu0 %v276
  %305 = vmatprep.subr.bf16.mxu0 0
  %306 = vmatpush1.bf16.msra.mxu0 %v275
  %307 = vmatprep.subr.bf16.mxu0 0
  %308 = vmatpush2.bf16.msra.mxu0 0
  %309 = vmatprep.subr.bf16.mxu0 0
  %310 = vmatpush2.bf16.msra.mxu0 0
  %311 = vmatprep.subr.bf16.mxu0 0
  %312 = vmatpush2.bf16.msra.mxu0 0
  %313 = vmatprep.subr.bf16.mxu0 0
  %314 = vmatpush2.bf16.msra.mxu0 0
  %315 = vmatprep.subr.bf16.mxu0 0
  %316 = vmatpush2.bf16.msra.mxu0 0
  %317 = vmatprep.subr.bf16.mxu0 0
  %318 = vmatpush2.bf16.msra.mxu0 0
  %319 = vmatprep.subr.bf16.mxu0 0
  %320 = vmatpush2.bf16.msra.mxu0 0
  %321 = vmatprep.subr.bf16.mxu0 0
  %322 = vmatpush2.bf16.msra.mxu0 0
  %323 = vmatprep.mubr.bf16.mxu0 0
  %324 = vmatmul.mubr.bf16.gmra.mxu0 %v212
  %v325 = vpop.f32.mrf.mxu0
  %v326 = vadd.f32 %v241, %v325
  %v327 = vpop.f32.mrf.mxu0
  %v328 = vpop.f32.mrf.mxu0
  %v329 = vadd.f32 %v241, %v328
  %v330 = vpop.f32.mrf.mxu0
  %331 = vmatprep.mubr.bf16.mxu0 0
  %332 = vmatmul.mubr.bf16.gmra.mxu0 %v213
  %v333 = vpop.f32.mrf.mxu0
  %v334 = vadd.f32 %v241, %v333
  %v335 = vpop.f32.mrf.mxu0
  %v336 = vpop.f32.mrf.mxu0
  %v337 = vadd.f32 %v241, %v336
  %v338 = vpop.f32.mrf.mxu0
  %339 = vmatprep.mubr.bf16.mxu0 0
  %340 = vmatmul.mubr.bf16.gmra.mxu0 %v214
  %v341 = vpop.f32.mrf.mxu0
  %v342 = vadd.f32 %v241, %v341
  %v343 = vpop.f32.mrf.mxu0
  %v344 = vpop.f32.mrf.mxu0
  %v345 = vadd.f32 %v241, %v344
  %v346 = vpop.f32.mrf.mxu0
  %347 = vmatprep.mubr.bf16.mxu0 0
  %348 = vmatmul.mubr.bf16.gmra.mxu0 %v215
  %v349 = vpop.f32.mrf.mxu0
  %v350 = vadd.f32 %v241, %v349
  %v351 = vpop.f32.mrf.mxu0
  %v352 = vpop.f32.mrf.mxu0
  %v353 = vadd.f32 %v241, %v352
  %v354 = vpop.f32.mrf.mxu0
  %355 = vmatprep.mubr.bf16.mxu0 0
  %356 = vmatmul.mubr.bf16.gmra.mxu0 %v216
  %v357 = vpop.f32.mrf.mxu0
  %v358 = vadd.f32 %v241, %v357
  %v359 = vpop.f32.mrf.mxu0
  %v360 = vpop.f32.mrf.mxu0
  %v361 = vadd.f32 %v241, %v360
  %v362 = vpop.f32.mrf.mxu0
  %363 = vmatprep.mubr.bf16.mxu0 0
  %364 = vmatmul.mubr.bf16.gmra.mxu0 %v217
  %v365 = vpop.f32.mrf.mxu0
  %v366 = vadd.f32 %v241, %v365
  %v367 = vpop.f32.mrf.mxu0
  %v368 = vpop.f32.mrf.mxu0
  %v369 = vadd.f32 %v241, %v368
  %v370 = vpop.f32.mrf.mxu0
  %371 = vmatprep.mubr.bf16.mxu0 0
  %372 = vmatmul.mubr.bf16.gmra.mxu0 %v218
  %v373 = vpop.f32.mrf.mxu0
  %v374 = vadd.f32 %v241, %v373
  %v375 = vpop.f32.mrf.mxu0
  %v376 = vpop.f32.mrf.mxu0
  %v377 = vadd.f32 %v241, %v376
  %v378 = vpop.f32.mrf.mxu0
  %379 = vmatprep.mubr.bf16.mxu0 0
  %380 = vmatmul.mubr.bf16.gmra.mxu0 %v219
  %v381 = vpop.f32.mrf.mxu0
  %v382 = vadd.f32 %v241, %v381
  %v383 = vpop.f32.mrf.mxu0
  %v384 = vpop.f32.mrf.mxu0
  %v385 = vadd.f32 %v241, %v384
  %v386 = vpop.f32.mrf.mxu0
  %387 = vdwg.mxu0
  %v388 = vmax.f32 %v326, 0.0
  %v389 = vmax.f32 %v329, 0.0
  %v390 = vmax.f32 %v334, 0.0
  %v391 = vmax.f32 %v337, 0.0
  %v392 = vmax.f32 %v342, 0.0
  %v393 = vmax.f32 %v345, 0.0
  %v394 = vmax.f32 %v350, 0.0
  %v395 = vmax.f32 %v353, 0.0
  %v396 = vmax.f32 %v358, 0.0
  %v397 = vmax.f32 %v361, 0.0
  %v398 = vmax.f32 %v366, 0.0
  %v399 = vmax.f32 %v369, 0.0
  %v400 = vmax.f32 %v374, 0.0
  %v401 = vmax.f32 %v377, 0.0
  %v402 = vmax.f32 %v382, 0.0
  %v403 = vmax.f32 %v385, 0.0
  %v404 = vpack.c.bf16 %v389, %v388
  %v405 = vpack.c.bf16 %v391, %v390
  %v406 = vpack.c.bf16 %v393, %v392
  %v407 = vpack.c.bf16 %v395, %v394
  %v408 = vpack.c.bf16 %v397, %v396
  %v409 = vpack.c.bf16 %v399, %v398
  %v410 = vpack.c.bf16 %v401, %v400
  %v411 = vpack.c.bf16 %v403, %v402
  %v412 = vld [vmem:[%s5] sm:$0xf]
  %v413 = vld [vmem:[%s5 + $0x4] sm:$0xf]
  %v414 = vld [vmem:[%s5 + $0x8] sm:$0xf]
  %v415 = vld [vmem:[%s5 + $0xc] sm:$0xf]
  %v416 = vld [vmem:[%s5 + $0x10] sm:$0xf]
  %v417 = vld [vmem:[%s5 + $0x14] sm:$0xf]
  %v418 = vld [vmem:[%s5 + $0x18] sm:$0xf]
  %v419 = vld [vmem:[%s5 + $0x1c] sm:$0xf]
  %v420 = vld [vmem:[%s6] sm:$0x1]
  %v422 = vlaneseq
  %v423 = vshrl.u32 %v422, 7
  %v424 = vsub.s32 0, %v423
  %v425 = vrot.slane %v420, %v424
  %v435 = vunpack.c.l.b16 %v412
  %v436 = vunpack.c.l.b16 %v413
  %v437 = vunpack.c.l.b16 %v414
  %v438 = vunpack.c.l.b16 %v415
  %v439 = vunpack.c.l.b16 %v416
  %v440 = vunpack.c.l.b16 %v417
  %v441 = vunpack.c.l.b16 %v418
  %v442 = vunpack.c.l.b16 %v419
  %v443 = vpack.c.b16 %v436, %v435
  %v444 = vpack.c.b16 %v438, %v437
  %v445 = vpack.c.b16 %v440, %v439
  %v446 = vpack.c.b16 %v442, %v441
  %vm451 = vcmask 523264
  %v453 = vsel %vm451, %v404, 0
  %v456 = vsel %vm451, %v405, 0
  %v459 = vsel %vm451, %v406, 0
  %v462 = vsel %vm451, %v407, 0
  %v465 = vsel %vm451, %v408, 0
  %v468 = vsel %vm451, %v409, 0
  %v471 = vsel %vm451, %v410, 0
  %v474 = vsel %vm451, %v411, 0
  %476 = vmatprep.subr.bf16.mxu0 0
  %477 = vmatpush1.bf16.msra.mxu0 0
  %478 = vmatprep.subr.bf16.mxu0 0
  %479 = vmatpush1.bf16.msra.mxu0 0
  %480 = vmatprep.subr.bf16.mxu0 0
  %481 = vmatpush1.bf16.msra.mxu0 0
  %482 = vmatprep.subr.bf16.mxu0 0
  %483 = vmatpush1.bf16.msra.mxu0 0
  %484 = vmatprep.subr.bf16.mxu0 0
  %485 = vmatpush1.bf16.msra.mxu0 %v446
  %486 = vmatprep.subr.bf16.mxu0 0
  %487 = vmatpush1.bf16.msra.mxu0 %v445
  %488 = vmatprep.subr.bf16.mxu0 0
  %489 = vmatpush1.bf16.msra.mxu0 %v444
  %490 = vmatprep.subr.bf16.mxu0 0
  %491 = vmatpush1.bf16.msra.mxu0 %v443
  %492 = vmatprep.subr.bf16.mxu0 0
  %493 = vmatpush2.bf16.msra.mxu0 0
  %494 = vmatprep.subr.bf16.mxu0 0
  %495 = vmatpush2.bf16.msra.mxu0 0
  %496 = vmatprep.subr.bf16.mxu0 0
  %497 = vmatpush2.bf16.msra.mxu0 0
  %498 = vmatprep.subr.bf16.mxu0 0
  %499 = vmatpush2.bf16.msra.mxu0 0
  %500 = vmatprep.subr.bf16.mxu0 0
  %501 = vmatpush2.bf16.msra.mxu0 0
  %502 = vmatprep.subr.bf16.mxu0 0
  %503 = vmatpush2.bf16.msra.mxu0 0
  %504 = vmatprep.subr.bf16.mxu0 0
  %505 = vmatpush2.bf16.msra.mxu0 0
  %506 = vmatprep.subr.bf16.mxu0 0
  %507 = vmatpush2.bf16.msra.mxu0 0
  %508 = vmatprep.mubr.bf16.mxu0 0
  %509 = vmatmul.mubr.bf16.gmra.mxu0 %v453
  %v510 = vpop.f32.mrf.mxu0
  %v511 = vadd.f32 %v425, %v510
  %v512 = vpop.f32.mrf.mxu0
  %v513 = vpop.f32.mrf.mxu0
  %v514 = vadd.f32 %v425, %v513
  %v515 = vpop.f32.mrf.mxu0
  %516 = vmatprep.mubr.bf16.mxu0 0
  %517 = vmatmul.mubr.bf16.gmra.mxu0 %v456
  %v518 = vpop.f32.mrf.mxu0
  %v519 = vadd.f32 %v425, %v518
  %v520 = vpop.f32.mrf.mxu0
  %v521 = vpop.f32.mrf.mxu0
  %v522 = vadd.f32 %v425, %v521
  %v523 = vpop.f32.mrf.mxu0
  %524 = vmatprep.mubr.bf16.mxu0 0
  %525 = vmatmul.mubr.bf16.gmra.mxu0 %v459
  %v526 = vpop.f32.mrf.mxu0
  %v527 = vadd.f32 %v425, %v526
  %v528 = vpop.f32.mrf.mxu0
  %v529 = vpop.f32.mrf.mxu0
  %v530 = vadd.f32 %v425, %v529
  %v531 = vpop.f32.mrf.mxu0
  %532 = vmatprep.mubr.bf16.mxu0 0
  %533 = vmatmul.mubr.bf16.gmra.mxu0 %v462
  %v534 = vpop.f32.mrf.mxu0
  %v535 = vadd.f32 %v425, %v534
  %v536 = vpop.f32.mrf.mxu0
  %v537 = vpop.f32.mrf.mxu0
  %v538 = vadd.f32 %v425, %v537
  %v539 = vpop.f32.mrf.mxu0
  %540 = vmatprep.mubr.bf16.mxu0 0
  %541 = vmatmul.mubr.bf16.gmra.mxu0 %v465
  %v542 = vpop.f32.mrf.mxu0
  %v543 = vadd.f32 %v425, %v542
  %v544 = vpop.f32.mrf.mxu0
  %v545 = vpop.f32.mrf.mxu0
  %v546 = vadd.f32 %v425, %v545
  %v547 = vpop.f32.mrf.mxu0
  %548 = vmatprep.mubr.bf16.mxu0 0
  %549 = vmatmul.mubr.bf16.gmra.mxu0 %v468
  %v550 = vpop.f32.mrf.mxu0
  %v551 = vadd.f32 %v425, %v550
  %v552 = vpop.f32.mrf.mxu0
  %v553 = vpop.f32.mrf.mxu0
  %v554 = vadd.f32 %v425, %v553
  %v555 = vpop.f32.mrf.mxu0
  %556 = vmatprep.mubr.bf16.mxu0 0
  %557 = vmatmul.mubr.bf16.gmra.mxu0 %v471
  %v558 = vpop.f32.mrf.mxu0
  %v559 = vadd.f32 %v425, %v558
  %v560 = vpop.f32.mrf.mxu0
  %v561 = vpop.f32.mrf.mxu0
  %v562 = vadd.f32 %v425, %v561
  %v563 = vpop.f32.mrf.mxu0
  %564 = vmatprep.mubr.bf16.mxu0 0
  %565 = vmatmul.mubr.bf16.gmra.mxu0 %v474
  %v566 = vpop.f32.mrf.mxu0
  %v567 = vadd.f32 %v425, %v566
  %v568 = vpop.f32.mrf.mxu0
  %v569 = vpop.f32.mrf.mxu0
  %v570 = vadd.f32 %v425, %v569
  %v571 = vpop.f32.mrf.mxu0
  %572 = vdwg.mxu0
  %vm573 = vcmask 64512
  %574 = vst.msk [vmem:[%s7] sm:$0xff] %vm573, %v511
  %575 = vst.msk [vmem:[%s7 + $0x8] sm:$0xff] %vm573, %v514
  %576 = vst.msk [vmem:[%s7 + $0x10] sm:$0xff] %vm573, %v519
  %577 = vst.msk [vmem:[%s7 + $0x18] sm:$0xff] %vm573, %v522
  %578 = vst.msk [vmem:[%s7 + $0x20] sm:$0xff] %vm573, %v527
  %579 = vst.msk [vmem:[%s7 + $0x28] sm:$0xff] %vm573, %v530
  %580 = vst.msk [vmem:[%s7 + $0x30] sm:$0xff] %vm573, %v535
  %581 = vst.msk [vmem:[%s7 + $0x38] sm:$0xff] %vm573, %v538
  %582 = vst.msk [vmem:[%s7 + $0x40] sm:$0xff] %vm573, %v543
  %583 = vst.msk [vmem:[%s7 + $0x48] sm:$0xff] %vm573, %v546
  %584 = vst.msk [vmem:[%s7 + $0x50] sm:$0xff] %vm573, %v551
  %585 = vst.msk [vmem:[%s7 + $0x58] sm:$0xff] %vm573, %v554
  %586 = vst.msk [vmem:[%s7 + $0x60] sm:$0xff] %vm573, %v559
  %587 = vst.msk [vmem:[%s7 + $0x68] sm:$0xff] %vm573, %v562
  %588 = vst.msk [vmem:[%s7 + $0x70] sm:$0xff] %vm573, %v567
  %589 = vst.msk [vmem:[%s7 + $0x78] sm:$0xff] %vm573, %v570
  // Predicated region
  $region30: #{tpu_custom_call.1} parent=0 // pred_check
    _
  $region31: #{tpu_custom_call.1} parent=0 // pred_check_branch
    %591 = sbr.rel (0) target = $region33
  $region32: #{tpu_custom_call.1} parent=0 // pred_region
    _
  $region33: #{tpu_custom_call.1} parent=0 // pred_fallthru
    _
  // Predicated region
  $region34: #{tpu_custom_call.1} parent=0 // pred_check
    _
  $region35: #{tpu_custom_call.1} parent=0 // pred_check_branch
    %593 = sbr.rel (0) target = $region37
  $region36: #{tpu_custom_call.1} parent=0 // pred_region
    _
  $region37: #{tpu_custom_call.1} parent=0 // pred_fallthru
    _

</llo_original>
